<compile_context>
chip_gen: v7x
topology: tpu7x:2x2x1
jax: 0.10.0
libtpu: 0.0.40
codegen_flags: <defaults>
</compile_context>

<pallas_src>
import functools
import math

import jax
import jax.numpy as jnp
from jax.experimental import pallas as pl
from jax.experimental.pallas import tpu as pltpu


# Explicit scoped-VMEM limit: above the 16/32 MiB defaults (v5e / v6e-v7x),
# below v7x's ~56 MiB usable headroom of its 64 MiB physical VMEM.
_VMEM_LIMIT_BYTES = 48 * 1024 * 1024


def _round_up(n, m):
    return ((n + m - 1) // m) * m


def _pick_time_chunk(T, cap=8):
    """Largest divisor of T that is <= cap (inner loop is fully unrolled)."""
    for c in range(min(cap, T), 0, -1):
        if T % c == 0:
            return c
    return 1


# ----------------------------------------------------------------------------
# Row-tiled  sum_i(x_i @ w_i) + b  kernels (pre-gate projection & final Linear)
# ----------------------------------------------------------------------------
def _matmul1_kernel(x_ref, w_ref, b_ref, o_ref):
    o_ref[...] = (jnp.dot(x_ref[...], w_ref[...],
                          preferred_element_type=jnp.float32)
                  + b_ref[...]).astype(o_ref.dtype)


def _matmul2_kernel(xa_ref, xb_ref, wa_ref, wb_ref, b_ref, o_ref):
    acc = jnp.dot(xa_ref[...], wa_ref[...], preferred_element_type=jnp.float32)
    acc = acc + jnp.dot(xb_ref[...], wb_ref[...],
                        preferred_element_type=jnp.float32)
    o_ref[...] = (acc + b_ref[...]).astype(o_ref.dtype)


def matmul_bias(x_list, w_list, b, out_dtype, *, bm_max=512):
    """Pipelined row-tiled  sum_i(x_i @ w_i) + b.

    The two-input form lets [fwd | bwd] feature halves be consumed as two
    matmuls, so the HBM concat of the bidirectional outputs is never built.
    """
    M = x_list[0].shape[0]
    Dout = w_list[0].shape[1]
    bm = M if M <= bm_max else bm_max            # fixed tile; tail is masked
    grid = (pl.cdiv(M, bm),)
    in_specs = [pl.BlockSpec((bm, x.shape[1]), lambda i: (i, 0))
                for x in x_list]
    in_specs += [pl.BlockSpec(w.shape, lambda i: (0, 0)) for w in w_list]
    in_specs += [pl.BlockSpec((1, Dout), lambda i: (0, 0))]
    kernel = _matmul1_kernel if len(x_list) == 1 else _matmul2_kernel
    return pl.pallas_call(
        kernel,
        out_shape=jax.ShapeDtypeStruct((M, Dout), out_dtype),
        grid_spec=pltpu.PrefetchScalarGridSpec(
            num_scalar_prefetch=0,
            grid=grid,
            in_specs=in_specs,
            out_specs=pl.BlockSpec((bm, Dout), lambda i: (i, 0)),
        ),
        compiler_params=pltpu.CompilerParams(
            dimension_semantics=("parallel",),
            vmem_limit_bytes=_VMEM_LIMIT_BYTES),
    )(*x_list, *w_list, b)


# ----------------------------------------------------------------------------
# Bidirectional LSTM recurrence: time-chunked grid, fused fwd+bwd per step
# ----------------------------------------------------------------------------
def _bilstm_rec_kernel(pre_c_ref, pre_m_ref, mask_ref, whh_ref, h0_ref, c0_ref,
                       out_f_ref, out_b_ref, hT_ref, cT_ref,
                       h_scr, c_scr, *, TC, D):
    # pre_c_ref : (TC, Bp, 8D) bf16  pre-gates, time chunk c      (interleaved)
    # pre_m_ref : (TC, Bp, 8D) bf16  pre-gates, mirrored chunk NC-1-c
    # mask_ref  : (Bp, 8D)     i32   1 on forward-direction gate columns
    # whh_ref   : (2D, 8D)     bf16  block-diag, interleaved gate columns
    # h0/c0     : (Bp, 2D)     f32   [fwd | bwd]
    # out_f/b   : (TC, Bp, D)  bf16  per-step hidden, each direction
    # hT/cT     : (Bp, 2D)     f32   final states
    c = pl.program_id(0)

    @pl.when(c == 0)
    def _():
        h_scr[...] = h0_ref[...]
        c_scr[...] = c0_ref[...]

    whh = whh_ref[...]                            # held in vregs for the chunk
    is_fwd_col = mask_ref[...] != 0               # hoisted out of the loop

    h = h_scr[...]                                # (Bp, 2D) f32 [h_f | h_b]
    cst = c_scr[...]                              # (Bp, 2D) f32 [c_f | c_b]

    # Deliberate full unroll of the short, static per-chunk time loop so the
    # scheduler can overlap step t's EUP/VPU cell work with step t+1's matmul.
    for t in range(TC):
        # Fused recurrent matmul for both directions: (Bp,2D) @ (2D,8D).
        rec = jnp.dot(h.astype(whh.dtype), whh,
                      preferred_element_type=jnp.float32)        # (Bp, 8D)

        # fwd gates come from chunk c at row t, bwd gates from the mirrored
        # chunk at row TC-1-t (in-kernel time reversal, static indices).
        gx = jnp.where(is_fwd_col, pre_c_ref[t], pre_m_ref[TC - 1 - t])
        gates = rec + gx.astype(jnp.float32)                     # (Bp, 8D)

        # Interleaved gate layout -> each nonlinearity runs once at 2D width.
        i = jax.nn.sigmoid(gates[:, 0 * D:2 * D])   # [i_f | i_b]
        f = jax.nn.sigmoid(gates[:, 2 * D:4 * D])   # [f_f | f_b]
        g = jnp.tanh(gates[:, 4 * D:6 * D])         # [g_f | g_b]
        o = jax.nn.sigmoid(gates[:, 6 * D:8 * D])   # [o_f | o_b]

        cst = f * cst + i * g
        h = o * jnp.tanh(cst)                        # [h_f | h_b]

        out_f_ref[t] = h[:, 0:D].astype(out_f_ref.dtype)
        out_b_ref[TC - 1 - t] = h[:, D:2 * D].astype(out_b_ref.dtype)

    h_scr[...] = h
    c_scr[...] = cst
    hT_ref[...] = h
    cT_ref[...] = cst


def bilstm_recurrence(pre, w_hh, h0, c0, *, T, Bp, D):
    """Run the bidirectional recurrence over pre-computed pre-gates."""
    TC = _pick_time_chunk(T)
    NC = T // TC
    kernel = functools.partial(_bilstm_rec_kernel, TC=TC, D=D)

    # Constant column mask: 1 where the (interleaved) gate column belongs to
    # the forward direction.  Passed in as data to avoid in-kernel int div/mod.
    gate_block = jnp.arange(8 * D, dtype=jnp.int32) // D
    fwd_mask = jnp.broadcast_to(((gate_block % 2) == 0).astype(jnp.int32),
                                (Bp, 8 * D))

    out_shape = (
        jax.ShapeDtypeStruct((T, Bp, D), jnp.bfloat16),   # out_fwd
        jax.ShapeDtypeStruct((T, Bp, D), jnp.bfloat16),   # out_bwd (time order)
        jax.ShapeDtypeStruct((Bp, 2 * D), jnp.float32),   # h_T [fwd|bwd]
        jax.ShapeDtypeStruct((Bp, 2 * D), jnp.float32),   # c_T [fwd|bwd]
    )
    grid_spec = pltpu.PrefetchScalarGridSpec(
        num_scalar_prefetch=0,
        grid=(NC,),
        in_specs=[
            pl.BlockSpec((TC, Bp, 8 * D), lambda c: (c, 0, 0)),
            pl.BlockSpec((TC, Bp, 8 * D), lambda c: (NC - 1 - c, 0, 0)),
            pl.BlockSpec((Bp, 8 * D), lambda c: (0, 0)),
            pl.BlockSpec((2 * D, 8 * D), lambda c: (0, 0)),
            pl.BlockSpec((Bp, 2 * D), lambda c: (0, 0)),
            pl.BlockSpec((Bp, 2 * D), lambda c: (0, 0)),
        ],
        out_specs=(
            pl.BlockSpec((TC, Bp, D), lambda c: (c, 0, 0)),
            pl.BlockSpec((TC, Bp, D), lambda c: (NC - 1 - c, 0, 0)),
            pl.BlockSpec((Bp, 2 * D), lambda c: (0, 0)),
            pl.BlockSpec((Bp, 2 * D), lambda c: (0, 0)),
        ),
        scratch_shapes=[
            pltpu.VMEM((Bp, 2 * D), jnp.float32),   # h carry [fwd|bwd]
            pltpu.VMEM((Bp, 2 * D), jnp.float32),   # c carry [fwd|bwd]
        ],
    )
    return pl.pallas_call(
        kernel,
        out_shape=out_shape,
        grid_spec=grid_spec,
        compiler_params=pltpu.CompilerParams(
            dimension_semantics=("arbitrary",),     # sequential carry
            vmem_limit_bytes=_VMEM_LIMIT_BYTES),
    )(pre, pre, fwd_mask, w_hh, h0, c0)


# ----------------------------------------------------------------------------
# BLSTM forward (glue in plain JAX; heavy lifting in the kernels above)
# ----------------------------------------------------------------------------
def blstm_forward(x, prepared, hidden=None):
    T, B, D = x.shape
    L = len(prepared["layers"])
    Bp = _round_up(B, 8)                       # f32 sublane fill

    xp = x if Bp == B else jnp.pad(x, ((0, 0), (0, Bp - B), (0, 0)))
    if hidden is None:
        h0 = jnp.zeros((2 * L, Bp, D), jnp.float32)
        c0 = jnp.zeros((2 * L, Bp, D), jnp.float32)
    else:
        h0, c0 = hidden
        h0 = h0.astype(jnp.float32)
        c0 = c0.astype(jnp.float32)
        if Bp != B:
            pad = ((0, 0), (0, Bp - B), (0, 0))
            h0 = jnp.pad(h0, pad)
            c0 = jnp.pad(c0, pad)

    cur_f = xp.astype(jnp.bfloat16).reshape(T * Bp, D)
    cur_b = None
    h_list, c_list = [], []
    for li, lp in enumerate(prepared["layers"]):
        # Input projection for all timesteps & both directions (bf16 pre-gates
        # to HBM, streamed in time chunks by the recurrence kernel).
        if li == 0:
            pre2d = matmul_bias([cur_f], [lp["w_x"]], lp["b"], jnp.bfloat16)
        else:
            pre2d = matmul_bias([cur_f, cur_b], [lp["w_xf"], lp["w_xb"]],
                                lp["b"], jnp.bfloat16)
        pre = pre2d.reshape(T, Bp, 8 * D)

        h0l = jnp.concatenate([h0[2 * li], h0[2 * li + 1]], axis=-1)
        c0l = jnp.concatenate([c0[2 * li], c0[2 * li + 1]], axis=-1)
        out_f, out_b, hT, cT = bilstm_recurrence(
            pre, lp["w_hh"], h0l, c0l, T=T, Bp=Bp, D=D)

        cur_f = out_f.reshape(T * Bp, D)
        cur_b = out_b.reshape(T * Bp, D)
        h_list += [hT[:B, :D], hT[:B, D:]]
        c_list += [cT[:B, :D], cT[:B, D:]]

    lin = prepared["linear"]
    y2d = matmul_bias([cur_f, cur_b], [lin["w_f"], lin["w_b"]], lin["b"],
                      jnp.float32)
    y = y2d.reshape(T, Bp, D)[:, :B]
    return y, (jnp.stack(h_list, 0), jnp.stack(c_list, 0))


# ----------------------------------------------------------------------------
# Parameter init (PyTorch-style uniform) and one-time kernel-layout prep
# ----------------------------------------------------------------------------
def init_params(key, dim, num_layers=2):
    k = 1.0 / math.sqrt(dim)
    params = {"lstm": []}
    for layer in range(num_layers):
        in_dim = dim if layer == 0 else 2 * dim
        lp = {}
        for tag in ("f", "b"):
            key, k1, k2, k3, k4 = jax.random.split(key, 5)
            lp[f"w_ih_{tag}"] = jax.random.uniform(
                k1, (4 * dim, in_dim), jnp.float32, -k, k)
            lp[f"w_hh_{tag}"] = jax.random.uniform(
                k2, (4 * dim, dim), jnp.float32, -k, k)
            lp[f"b_ih_{tag}"] = jax.random.uniform(
                k3, (4 * dim,), jnp.float32, -k, k)
            lp[f"b_hh_{tag}"] = jax.random.uniform(
                k4, (4 * dim,), jnp.float32, -k, k)
        params["lstm"].append(lp)
    key, k1, k2 = jax.random.split(key, 3)
    kl = 1.0 / math.sqrt(2 * dim)
    params["linear"] = {
        "w": jax.random.uniform(k1, (dim, 2 * dim), jnp.float32, -kl, kl),
        "b": jax.random.uniform(k2, (dim,), jnp.float32, -kl, kl),
    }
    return params


def _interleave_gate_cols(wf_t, wb_t, D):
    """(K, 4D) fwd / bwd (gate order i,f,g,o) -> (K, 8D) with columns
    [i_f i_b | f_f f_b | g_f g_b | o_f o_b]."""
    parts = []
    for g in range(4):
        parts.append(wf_t[..., g * D:(g + 1) * D])
        parts.append(wb_t[..., g * D:(g + 1) * D])
    return jnp.concatenate(parts, axis=-1)


def prepare_params(params, dim):
    """One-time conversion to kernel layout (transposed, interleaved, bf16)."""
    D = dim
    layers = []
    for li, p in enumerate(params["lstm"]):
        w_x = _interleave_gate_cols(
            p["w_ih_f"].T, p["w_ih_b"].T, D).astype(jnp.bfloat16)
        zero = jnp.zeros_like(p["w_hh_f"].T)                       # (D, 4D)
        w_hh_top = _interleave_gate_cols(p["w_hh_f"].T, zero, D)
        w_hh_bot = _interleave_gate_cols(zero, p["w_hh_b"].T, D)
        w_hh = jnp.concatenate(
            [w_hh_top, w_hh_bot], axis=0).astype(jnp.bfloat16)     # (2D, 8D)
        b = _interleave_gate_cols(
            (p["b_ih_f"] + p["b_hh_f"]).reshape(1, 4 * D),
            (p["b_ih_b"] + p["b_hh_b"]).reshape(1, 4 * D),
            D).astype(jnp.float32)                                 # (1, 8D)
        lp = {"w_hh": w_hh, "b": b}
        if li == 0:
            lp["w_x"] = w_x                                        # (D, 8D)
        else:
            lp["w_xf"] = w_x[:D]                                   # fwd rows
            lp["w_xb"] = w_x[D:]                                   # bwd rows
        layers.append(lp)
    w_lin_t = params["linear"]["w"].T                              # (2D, D)
    lin = {
        "w_f": w_lin_t[:D].astype(jnp.bfloat16),
        "w_b": w_lin_t[D:].astype(jnp.bfloat16),
        "b": params["linear"]["b"].reshape(1, D).astype(jnp.float32),
    }
    return {"layers": layers, "linear": lin}


# ----------------------------------------------------------------------------
# Pure-JAX f32 reference (for correctness check)
# ----------------------------------------------------------------------------
def _ref_lstm_dir(x, w_ih, w_hh, b_ih, b_hh, h0, c0):
    def step(carry, x_t):
        h, c = carry
        gates = (x_t @ w_ih.T + b_ih + h @ w_hh.T + b_hh)
        i, f, g, o = jnp.split(gates, 4, axis=-1)
        i, f, o = jax.nn.sigmoid(i), jax.nn.sigmoid(f), jax.nn.sigmoid(o)
        g = jnp.tanh(g)
        c = f * c + i * g
        h = o * jnp.tanh(c)
        return (h, c), h

    (hT, cT), out = jax.lax.scan(step, (h0, c0), x)
    return out, hT, cT


def blstm_ref(x, params, num_layers=2):
    T, B, D = x.shape
    h0 = jnp.zeros((B, D), jnp.float32)
    c0 = jnp.zeros((B, D), jnp.float32)
    h_out, c_out = [], []
    layer_in = x
    for layer in range(num_layers):
        p = params["lstm"][layer]
        of, hf, cf = _ref_lstm_dir(layer_in, p["w_ih_f"], p["w_hh_f"],
                                   p["b_ih_f"], p["b_hh_f"], h0, c0)
        ob, hb, cb = _ref_lstm_dir(layer_in[::-1], p["w_ih_b"], p["w_hh_b"],
                                   p["b_ih_b"], p["b_hh_b"], h0, c0)
        ob = ob[::-1]
        layer_in = jnp.concatenate([of, ob], axis=-1)
        h_out += [hf, hb]
        c_out += [cf, cb]
    y = layer_in @ params["linear"]["w"].T + params["linear"]["b"]
    return y, (jnp.stack(h_out, 0), jnp.stack(c_out, 0))


# ----------------------------------------------------------------------------
if __name__ == "__main__":
    T, B, D = 8, 2, 32          # seq_len, batch, dim

    key = jax.random.PRNGKey(0)
    key, kp, kx = jax.random.split(key, 3)
    params = init_params(kp, D)
    prepared = prepare_params(params, D)      # one-time weight layout prep
    x = jax.random.normal(kx, (T, B, D), jnp.float32)

    fwd = jax.jit(blstm_forward)
    y, (h_n, c_n) = fwd(x, prepared)
    jax.block_until_ready((y, h_n, c_n))

    y_ref, (h_ref, c_ref) = blstm_ref(x, params)
    assert y.shape == (T, B, D)
    assert h_n.shape == (4, B, D) and c_n.shape == (4, B, D)
    # bf16 MXU matmuls + bf16 pre-gate / activation storage (f32 accumulation,
    # f32 gate math) vs a pure-f32 reference -> loose tolerance.  Real bugs
    # (gate order, packing, reversal, bias) give errors orders of magnitude
    # larger than this.
    assert jnp.allclose(y, y_ref, atol=4e-2, rtol=4e-2)
    assert jnp.allclose(h_n, h_ref, atol=4e-2, rtol=4e-2)
    assert jnp.allclose(c_n, c_ref, atol=4e-2, rtol=4e-2)

    print("KERNEL_OK")
</pallas_src>

<mosaic_0001>
module attributes {stable_mosaic.version = 11 : i64} {
  func.func @_matmul2_kernel(%arg0: i32, %arg1: memref<64x32xbf16, #tpu.memory_space<vmem>>, %arg2: memref<64x32xbf16, #tpu.memory_space<vmem>>, %arg3: memref<32x256xbf16, #tpu.memory_space<vmem>>, %arg4: memref<32x256xbf16, #tpu.memory_space<vmem>>, %arg5: memref<1x256xf32, #tpu.memory_space<vmem>>, %arg6: memref<64x256xbf16, #tpu.memory_space<vmem>>) attributes {dimension_semantics = [#tpu.dimension_semantics<parallel>], iteration_bounds = array<i64: 1>, scalar_prefetch = 0 : i64, scratch_operands = 0 : i64, tpu.core_type = #tpu.core_type<tc>, window_params = [{transform_indices = @transform_0, window_bounds = array<i64: 64, 32>}, {transform_indices = @transform_1, window_bounds = array<i64: 64, 32>}, {pipeline_mode = #tpu.pipeline_mode<synchronous>, transform_indices = @transform_2, window_bounds = array<i64: 32, 256>}, {pipeline_mode = #tpu.pipeline_mode<synchronous>, transform_indices = @transform_3, window_bounds = array<i64: 32, 256>}, {pipeline_mode = #tpu.pipeline_mode<synchronous>, transform_indices = @transform_4, window_bounds = array<i64: 1, 256>}, {transform_indices = @transform_5, window_bounds = array<i64: 64, 256>}]} {
    %c0 = arith.constant 0 : index
    %c0_0 = arith.constant 0 : index
    %0 = vector.load %arg1[%c0, %c0_0] : memref<64x32xbf16, #tpu.memory_space<vmem>>, vector<64x32xbf16>
    %c0_1 = arith.constant 0 : index
    %c0_2 = arith.constant 0 : index
    %1 = vector.load %arg3[%c0_1, %c0_2] : memref<32x256xbf16, #tpu.memory_space<vmem>>, vector<32x256xbf16>
    %cst = arith.constant dense<0.000000e+00> : vector<64x256xf32>
    %2 = tpu.matmul %0, %1, %cst {dimension_numbers = #tpu.dot_dimension_numbers<[1], [0], [0], [1], [0, 0, 1, 1], [], []>} : vector<64x32xbf16>, vector<32x256xbf16>, vector<64x256xf32> -> vector<64x256xf32>
    %c0_3 = arith.constant 0 : index
    %c0_4 = arith.constant 0 : index
    %3 = vector.load %arg2[%c0_3, %c0_4] : memref<64x32xbf16, #tpu.memory_space<vmem>>, vector<64x32xbf16>
    %c0_5 = arith.constant 0 : index
    %c0_6 = arith.constant 0 : index
    %4 = vector.load %arg4[%c0_5, %c0_6] : memref<32x256xbf16, #tpu.memory_space<vmem>>, vector<32x256xbf16>
    %cst_7 = arith.constant dense<0.000000e+00> : vector<64x256xf32>
    %5 = tpu.matmul %3, %4, %cst_7 {dimension_numbers = #tpu.dot_dimension_numbers<[1], [0], [0], [1], [0, 0, 1, 1], [], []>} : vector<64x32xbf16>, vector<32x256xbf16>, vector<64x256xf32> -> vector<64x256xf32>
    %6 = arith.addf %2, %5 : vector<64x256xf32>
    %c0_8 = arith.constant 0 : index
    %c0_9 = arith.constant 0 : index
    %7 = vector.load %arg5[%c0_8, %c0_9] : memref<1x256xf32, #tpu.memory_space<vmem>>, vector<1x256xf32>
    %8 = vector.broadcast %7 : vector<1x256xf32> to vector<64x256xf32>
    %9 = arith.addf %6, %8 : vector<64x256xf32>
    %10 = arith.truncf %9 : vector<64x256xf32> to vector<64x256xbf16>
    %c0_10 = arith.constant 0 : index
    %c0_11 = arith.constant 0 : index
    %11 = vector.load %arg6[%c0_10, %c0_11] : memref<64x256xbf16, #tpu.memory_space<vmem>>, vector<64x256xbf16>
    tpu.vector_store %arg6[%c0_10, %c0_11], %10 {strides = array<i32>} : memref<64x256xbf16, #tpu.memory_space<vmem>>, vector<64x256xbf16>,
    return
  }
  func.func @transform_0(%arg0: i32) -> (i32, i32) {
    %c0_i32 = arith.constant 0 : i32
    %c0_i32_0 = arith.constant 0 : i32
    return %arg0, %c0_i32 : i32, i32
  }
  func.func @transform_1(%arg0: i32) -> (i32, i32) {
    %c0_i32 = arith.constant 0 : i32
    %c0_i32_0 = arith.constant 0 : i32
    return %arg0, %c0_i32 : i32, i32
  }
  func.func @transform_2(%arg0: i32) -> (i32, i32) {
    %c0_i32 = arith.constant 0 : i32
    %c0_i32_0 = arith.constant 0 : i32
    %c0_i32_1 = arith.constant 0 : i32
    return %c0_i32, %c0_i32_0 : i32, i32
  }
  func.func @transform_3(%arg0: i32) -> (i32, i32) {
    %c0_i32 = arith.constant 0 : i32
    %c0_i32_0 = arith.constant 0 : i32
    %c0_i32_1 = arith.constant 0 : i32
    return %c0_i32, %c0_i32_0 : i32, i32
  }
  func.func @transform_4(%arg0: i32) -> (i32, i32) {
    %c0_i32 = arith.constant 0 : i32
    %c0_i32_0 = arith.constant 0 : i32
    %c0_i32_1 = arith.constant 0 : i32
    return %c0_i32, %c0_i32_0 : i32, i32
  }
  func.func @transform_5(%arg0: i32) -> (i32, i32) {
    %c0_i32 = arith.constant 0 : i32
    %c0_i32_0 = arith.constant 0 : i32
    return %arg0, %c0_i32 : i32, i32
  }
}

module attributes {stable_mosaic.version = 11 : i64} {
  func.func @_matmul1_kernel(%arg0: i32, %arg1: memref<64x32xbf16, #tpu.memory_space<vmem>>, %arg2: memref<32x256xbf16, #tpu.memory_space<vmem>>, %arg3: memref<1x256xf32, #tpu.memory_space<vmem>>, %arg4: memref<64x256xbf16, #tpu.memory_space<vmem>>) attributes {dimension_semantics = [#tpu.dimension_semantics<parallel>], iteration_bounds = array<i64: 1>, scalar_prefetch = 0 : i64, scratch_operands = 0 : i64, tpu.core_type = #tpu.core_type<tc>, window_params = [{transform_indices = @transform_0, window_bounds = array<i64: 64, 32>}, {pipeline_mode = #tpu.pipeline_mode<synchronous>, transform_indices = @transform_1, window_bounds = array<i64: 32, 256>}, {pipeline_mode = #tpu.pipeline_mode<synchronous>, transform_indices = @transform_2, window_bounds = array<i64: 1, 256>}, {transform_indices = @transform_3, window_bounds = array<i64: 64, 256>}]} {
    %c0 = arith.constant 0 : index
    %c0_0 = arith.constant 0 : index
    %0 = vector.load %arg1[%c0, %c0_0] : memref<64x32xbf16, #tpu.memory_space<vmem>>, vector<64x32xbf16>
    %c0_1 = arith.constant 0 : index
    %c0_2 = arith.constant 0 : index
    %1 = vector.load %arg2[%c0_1, %c0_2] : memref<32x256xbf16, #tpu.memory_space<vmem>>, vector<32x256xbf16>
    %cst = arith.constant dense<0.000000e+00> : vector<64x256xf32>
    %2 = tpu.matmul %0, %1, %cst {dimension_numbers = #tpu.dot_dimension_numbers<[1], [0], [0], [1], [0, 0, 1, 1], [], []>} : vector<64x32xbf16>, vector<32x256xbf16>, vector<64x256xf32> -> vector<64x256xf32>
    %c0_3 = arith.constant 0 : index
    %c0_4 = arith.constant 0 : index
    %3 = vector.load %arg3[%c0_3, %c0_4] : memref<1x256xf32, #tpu.memory_space<vmem>>, vector<1x256xf32>
    %4 = vector.broadcast %3 : vector<1x256xf32> to vector<64x256xf32>
    %5 = arith.addf %2, %4 : vector<64x256xf32>
    %6 = arith.truncf %5 : vector<64x256xf32> to vector<64x256xbf16>
    %c0_5 = arith.constant 0 : index
    %c0_6 = arith.constant 0 : index
    %7 = vector.load %arg4[%c0_5, %c0_6] : memref<64x256xbf16, #tpu.memory_space<vmem>>, vector<64x256xbf16>
    tpu.vector_store %arg4[%c0_5, %c0_6], %6 {strides = array<i32>} : memref<64x256xbf16, #tpu.memory_space<vmem>>, vector<64x256xbf16>,
    return
  }
  func.func @transform_0(%arg0: i32) -> (i32, i32) {
    %c0_i32 = arith.constant 0 : i32
    %c0_i32_0 = arith.constant 0 : i32
    return %arg0, %c0_i32 : i32, i32
  }
  func.func @transform_1(%arg0: i32) -> (i32, i32) {
    %c0_i32 = arith.constant 0 : i32
    %c0_i32_0 = arith.constant 0 : i32
    %c0_i32_1 = arith.constant 0 : i32
    return %c0_i32, %c0_i32_0 : i32, i32
  }
  func.func @transform_2(%arg0: i32) -> (i32, i32) {
    %c0_i32 = arith.constant 0 : i32
    %c0_i32_0 = arith.constant 0 : i32
    %c0_i32_1 = arith.constant 0 : i32
    return %c0_i32, %c0_i32_0 : i32, i32
  }
  func.func @transform_3(%arg0: i32) -> (i32, i32) {
    %c0_i32 = arith.constant 0 : i32
    %c0_i32_0 = arith.constant 0 : i32
    return %arg0, %c0_i32 : i32, i32
  }
}

module attributes {stable_mosaic.version = 11 : i64} {
  func.func @_matmul2_kernel(%arg0: i32, %arg1: memref<64x32xbf16, #tpu.memory_space<vmem>>, %arg2: memref<64x32xbf16, #tpu.memory_space<vmem>>, %arg3: memref<32x32xbf16, #tpu.memory_space<vmem>>, %arg4: memref<32x32xbf16, #tpu.memory_space<vmem>>, %arg5: memref<1x32xf32, #tpu.memory_space<vmem>>, %arg6: memref<64x32xf32, #tpu.memory_space<vmem>>) attributes {dimension_semantics = [#tpu.dimension_semantics<parallel>], iteration_bounds = array<i64: 1>, scalar_prefetch = 0 : i64, scratch_operands = 0 : i64, tpu.core_type = #tpu.core_type<tc>, window_params = [{transform_indices = @transform_0, window_bounds = array<i64: 64, 32>}, {transform_indices = @transform_1, window_bounds = array<i64: 64, 32>}, {pipeline_mode = #tpu.pipeline_mode<synchronous>, transform_indices = @transform_2, window_bounds = array<i64: 32, 32>}, {pipeline_mode = #tpu.pipeline_mode<synchronous>, transform_indices = @transform_3, window_bounds = array<i64: 32, 32>}, {pipeline_mode = #tpu.pipeline_mode<synchronous>, transform_indices = @transform_4, window_bounds = array<i64: 1, 32>}, {transform_indices = @transform_5, window_bounds = array<i64: 64, 32>}]} {
    %c0 = arith.constant 0 : index
    %c0_0 = arith.constant 0 : index
    %0 = vector.load %arg1[%c0, %c0_0] : memref<64x32xbf16, #tpu.memory_space<vmem>>, vector<64x32xbf16>
    %c0_1 = arith.constant 0 : index
    %c0_2 = arith.constant 0 : index
    %1 = vector.load %arg3[%c0_1, %c0_2] : memref<32x32xbf16, #tpu.memory_space<vmem>>, vector<32x32xbf16>
    %cst = arith.constant dense<0.000000e+00> : vector<64x32xf32>
    %2 = tpu.matmul %0, %1, %cst {dimension_numbers = #tpu.dot_dimension_numbers<[1], [0], [0], [1], [0, 0, 1, 1], [], []>} : vector<64x32xbf16>, vector<32x32xbf16>, vector<64x32xf32> -> vector<64x32xf32>
    %c0_3 = arith.constant 0 : index
    %c0_4 = arith.constant 0 : index
    %3 = vector.load %arg2[%c0_3, %c0_4] : memref<64x32xbf16, #tpu.memory_space<vmem>>, vector<64x32xbf16>
    %c0_5 = arith.constant 0 : index
    %c0_6 = arith.constant 0 : index
    %4 = vector.load %arg4[%c0_5, %c0_6] : memref<32x32xbf16, #tpu.memory_space<vmem>>, vector<32x32xbf16>
    %cst_7 = arith.constant dense<0.000000e+00> : vector<64x32xf32>
    %5 = tpu.matmul %3, %4, %cst_7 {dimension_numbers = #tpu.dot_dimension_numbers<[1], [0], [0], [1], [0, 0, 1, 1], [], []>} : vector<64x32xbf16>, vector<32x32xbf16>, vector<64x32xf32> -> vector<64x32xf32>
    %6 = arith.addf %2, %5 : vector<64x32xf32>
    %c0_8 = arith.constant 0 : index
    %c0_9 = arith.constant 0 : index
    %7 = vector.load %arg5[%c0_8, %c0_9] : memref<1x32xf32, #tpu.memory_space<vmem>>, vector<1x32xf32>
    %8 = vector.broadcast %7 : vector<1x32xf32> to vector<64x32xf32>
    %9 = arith.addf %6, %8 : vector<64x32xf32>
    %c0_10 = arith.constant 0 : index
    %c0_11 = arith.constant 0 : index
    %10 = vector.load %arg6[%c0_10, %c0_11] : memref<64x32xf32, #tpu.memory_space<vmem>>, vector<64x32xf32>
    tpu.vector_store %arg6[%c0_10, %c0_11], %9 {strides = array<i32>} : memref<64x32xf32, #tpu.memory_space<vmem>>, vector<64x32xf32>,
    return
  }
  func.func @transform_0(%arg0: i32) -> (i32, i32) {
    %c0_i32 = arith.constant 0 : i32
    %c0_i32_0 = arith.constant 0 : i32
    return %arg0, %c0_i32 : i32, i32
  }
  func.func @transform_1(%arg0: i32) -> (i32, i32) {
    %c0_i32 = arith.constant 0 : i32
    %c0_i32_0 = arith.constant 0 : i32
    return %arg0, %c0_i32 : i32, i32
  }
  func.func @transform_2(%arg0: i32) -> (i32, i32) {
    %c0_i32 = arith.constant 0 : i32
    %c0_i32_0 = arith.constant 0 : i32
    %c0_i32_1 = arith.constant 0 : i32
    return %c0_i32, %c0_i32_0 : i32, i32
  }
  func.func @transform_3(%arg0: i32) -> (i32, i32) {
    %c0_i32 = arith.constant 0 : i32
    %c0_i32_0 = arith.constant 0 : i32
    %c0_i32_1 = arith.constant 0 : i32
    return %c0_i32, %c0_i32_0 : i32, i32
  }
  func.func @transform_4(%arg0: i32) -> (i32, i32) {
    %c0_i32 = arith.constant 0 : i32
    %c0_i32_0 = arith.constant 0 : i32
    %c0_i32_1 = arith.constant 0 : i32
    return %c0_i32, %c0_i32_0 : i32, i32
  }
  func.func @transform_5(%arg0: i32) -> (i32, i32) {
    %c0_i32 = arith.constant 0 : i32
    %c0_i32_0 = arith.constant 0 : i32
    return %arg0, %c0_i32 : i32, i32
  }
}

module attributes {stable_mosaic.version = 11 : i64} {
  func.func @_bilstm_rec_kernel(%arg0: i32, %arg1: memref<8x8x256xbf16, #tpu.memory_space<vmem>>, %arg2: memref<8x8x256xbf16, #tpu.memory_space<vmem>>, %arg3: memref<8x256xi32, #tpu.memory_space<vmem>>, %arg4: memref<64x256xbf16, #tpu.memory_space<vmem>>, %arg5: memref<8x64xf32, #tpu.memory_space<vmem>>, %arg6: memref<8x64xf32, #tpu.memory_space<vmem>>, %arg7: memref<8x8x32xbf16, #tpu.memory_space<vmem>>, %arg8: memref<8x8x32xbf16, #tpu.memory_space<vmem>>, %arg9: memref<8x64xf32, #tpu.memory_space<vmem>>, %arg10: memref<8x64xf32, #tpu.memory_space<vmem>>, %arg11: memref<8x64xf32, #tpu.memory_space<vmem>>, %arg12: memref<8x64xf32, #tpu.memory_space<vmem>>) attributes {dimension_semantics = [#tpu.dimension_semantics<arbitrary>], iteration_bounds = array<i64: 1>, scalar_prefetch = 0 : i64, scratch_operands = 2 : i64, tpu.core_type = #tpu.core_type<tc>, window_params = [{transform_indices = @transform_0, window_bounds = array<i64: 8, 8, 256>}, {transform_indices = @transform_1, window_bounds = array<i64: 8, 8, 256>}, {pipeline_mode = #tpu.pipeline_mode<synchronous>, transform_indices = @transform_2, window_bounds = array<i64: 8, 256>}, {pipeline_mode = #tpu.pipeline_mode<synchronous>, transform_indices = @transform_3, window_bounds = array<i64: 64, 256>}, {pipeline_mode = #tpu.pipeline_mode<synchronous>, transform_indices = @transform_4, window_bounds = array<i64: 8, 64>}, {pipeline_mode = #tpu.pipeline_mode<synchronous>, transform_indices = @transform_5, window_bounds = array<i64: 8, 64>}, {transform_indices = @transform_6, window_bounds = array<i64: 8, 8, 32>}, {transform_indices = @transform_7, window_bounds = array<i64: 8, 8, 32>}, {pipeline_mode = #tpu.pipeline_mode<synchronous>, transform_indices = @transform_8, window_bounds = array<i64: 8, 64>}, {pipeline_mode = #tpu.pipeline_mode<synchronous>, transform_indices = @transform_9, window_bounds = array<i64: 8, 64>}]} {
    %c0_i32 = arith.constant 0 : i32
    %0 = arith.cmpi eq, %arg0, %c0_i32 : i32
    %1 = arith.extui %0 : i1 to i32
    %c0_i32_0 = arith.constant 0 : i32
    %2 = arith.cmpi ne, %1, %c0_i32_0 : i32
    scf.if %2 {
      %c0_137 = arith.constant 0 : index
      %c0_138 = arith.constant 0 : index
      %365 = vector.load %arg5[%c0_137, %c0_138] : memref<8x64xf32, #tpu.memory_space<vmem>>, vector<8x64xf32>
      %c0_139 = arith.constant 0 : index
      %c0_140 = arith.constant 0 : index
      %366 = vector.load %arg11[%c0_139, %c0_140] : memref<8x64xf32, #tpu.memory_space<vmem>>, vector<8x64xf32>
      tpu.vector_store %arg11[%c0_139, %c0_140], %365 {strides = array<i32>} : memref<8x64xf32, #tpu.memory_space<vmem>>, vector<8x64xf32>,
      %c0_141 = arith.constant 0 : index
      %c0_142 = arith.constant 0 : index
      %367 = vector.load %arg6[%c0_141, %c0_142] : memref<8x64xf32, #tpu.memory_space<vmem>>, vector<8x64xf32>
      %c0_143 = arith.constant 0 : index
      %c0_144 = arith.constant 0 : index
      %368 = vector.load %arg12[%c0_143, %c0_144] : memref<8x64xf32, #tpu.memory_space<vmem>>, vector<8x64xf32>
      tpu.vector_store %arg12[%c0_143, %c0_144], %367 {strides = array<i32>} : memref<8x64xf32, #tpu.memory_space<vmem>>, vector<8x64xf32>,
    } else {
    }
    %c0 = arith.constant 0 : index
    %c0_1 = arith.constant 0 : index
    %3 = vector.load %arg4[%c0, %c0_1] : memref<64x256xbf16, #tpu.memory_space<vmem>>, vector<64x256xbf16>
    %c0_2 = arith.constant 0 : index
    %c0_3 = arith.constant 0 : index
    %4 = vector.load %arg3[%c0_2, %c0_3] : memref<8x256xi32, #tpu.memory_space<vmem>>, vector<8x256xi32>
    %c0_i32_4 = arith.constant 0 : i32
    %5 = vector.broadcast %c0_i32_4 : i32 to vector<8x256xi32>
    %6 = arith.cmpi ne, %4, %5 : vector<8x256xi32>
    %c0_5 = arith.constant 0 : index
    %c0_6 = arith.constant 0 : index
    %7 = vector.load %arg11[%c0_5, %c0_6] : memref<8x64xf32, #tpu.memory_space<vmem>>, vector<8x64xf32>
    %c0_7 = arith.constant 0 : index
    %c0_8 = arith.constant 0 : index
    %8 = vector.load %arg12[%c0_7, %c0_8] : memref<8x64xf32, #tpu.memory_space<vmem>>, vector<8x64xf32>
    %9 = arith.truncf %7 : vector<8x64xf32> to vector<8x64xbf16>
    %cst = arith.constant dense<0.000000e+00> : vector<8x256xf32>
    %10 = tpu.matmul %9, %3, %cst {dimension_numbers = #tpu.dot_dimension_numbers<[1], [0], [0], [1], [0, 0, 1, 1], [], []>} : vector<8x64xbf16>, vector<64x256xbf16>, vector<8x256xf32> -> vector<8x256xf32>
    %c0_9 = arith.constant 0 : index
    %c0_10 = arith.constant 0 : index
    %c0_11 = arith.constant 0 : index
    %11 = vector.load %arg1[%c0_9, %c0_10, %c0_11] : memref<8x8x256xbf16, #tpu.memory_space<vmem>>, vector<1x8x256xbf16>
    %12 = vector.shape_cast %11 : vector<1x8x256xbf16> to vector<8x256xbf16>
    %c7 = arith.constant 7 : index
    %c0_12 = arith.constant 0 : index
    %c0_13 = arith.constant 0 : index
    %13 = vector.load %arg2[%c7, %c0_12, %c0_13] : memref<8x8x256xbf16, #tpu.memory_space<vmem>>, vector<1x8x256xbf16>
    %14 = vector.shape_cast %13 : vector<1x8x256xbf16> to vector<8x256xbf16>
    %15 = arith.select %6, %12, %14 : vector<8x256xi1>, vector<8x256xbf16>
    %16 = arith.extf %15 : vector<8x256xbf16> to vector<8x256xf32>
    %17 = arith.addf %10, %16 : vector<8x256xf32>
    %18 = vector.extract_strided_slice %17 {offsets = [0, 0], sizes = [8, 64], strides = [1, 1]} : vector<8x256xf32> to vector<8x64xf32>
    %19 = arith.negf %18 : vector<8x64xf32>
    %20 = math.exp %19 : vector<8x64xf32>
    %cst_14 = arith.constant 1.000000e+00 : f32
    %21 = vector.broadcast %cst_14 : f32 to vector<8x64xf32>
    %22 = arith.addf %21, %20 : vector<8x64xf32>
    %23 = arith.divf %21, %22 : vector<8x64xf32>
    %24 = vector.extract_strided_slice %17 {offsets = [0, 64], sizes = [8, 64], strides = [1, 1]} : vector<8x256xf32> to vector<8x64xf32>
    %25 = arith.negf %24 : vector<8x64xf32>
    %26 = math.exp %25 : vector<8x64xf32>
    %cst_15 = arith.constant 1.000000e+00 : f32
    %27 = vector.broadcast %cst_15 : f32 to vector<8x64xf32>
    %28 = arith.addf %27, %26 : vector<8x64xf32>
    %29 = arith.divf %27, %28 : vector<8x64xf32>
    %30 = vector.extract_strided_slice %17 {offsets = [0, 128], sizes = [8, 64], strides = [1, 1]} : vector<8x256xf32> to vector<8x64xf32>
    %31 = math.tanh %30 : vector<8x64xf32>
    %32 = vector.extract_strided_slice %17 {offsets = [0, 192], sizes = [8, 64], strides = [1, 1]} : vector<8x256xf32> to vector<8x64xf32>
    %33 = arith.negf %32 : vector<8x64xf32>
    %34 = math.exp %33 : vector<8x64xf32>
    %cst_16 = arith.constant 1.000000e+00 : f32
    %35 = vector.broadcast %cst_16 : f32 to vector<8x64xf32>
    %36 = arith.addf %35, %34 : vector<8x64xf32>
    %37 = arith.divf %35, %36 : vector<8x64xf32>
    %38 = arith.mulf %29, %8 : vector<8x64xf32>
    %39 = arith.mulf %23, %31 : vector<8x64xf32>
    %40 = arith.addf %38, %39 : vector<8x64xf32>
    %41 = math.tanh %40 : vector<8x64xf32>
    %42 = arith.mulf %37, %41 : vector<8x64xf32>
    %43 = vector.extract_strided_slice %42 {offsets = [0, 0], sizes = [8, 32], strides = [1, 1]} : vector<8x64xf32> to vector<8x32xf32>
    %44 = arith.truncf %43 : vector<8x32xf32> to vector<8x32xbf16>
    %c0_17 = arith.constant 0 : index
    %c0_18 = arith.constant 0 : index
    %c0_19 = arith.constant 0 : index
    %45 = vector.load %arg7[%c0_17, %c0_18, %c0_19] : memref<8x8x32xbf16, #tpu.memory_space<vmem>>, vector<1x8x32xbf16>
    %46 = vector.shape_cast %45 : vector<1x8x32xbf16> to vector<8x32xbf16>
    %47 = vector.shape_cast %44 : vector<8x32xbf16> to vector<1x8x32xbf16>
    tpu.vector_store %arg7[%c0_17, %c0_18, %c0_19], %47 {strides = array<i32>} : memref<8x8x32xbf16, #tpu.memory_space<vmem>>, vector<1x8x32xbf16>,
    %48 = vector.extract_strided_slice %42 {offsets = [0, 32], sizes = [8, 32], strides = [1, 1]} : vector<8x64xf32> to vector<8x32xf32>
    %49 = arith.truncf %48 : vector<8x32xf32> to vector<8x32xbf16>
    %c7_20 = arith.constant 7 : index
    %c0_21 = arith.constant 0 : index
    %c0_22 = arith.constant 0 : index
    %50 = vector.load %arg8[%c7_20, %c0_21, %c0_22] : memref<8x8x32xbf16, #tpu.memory_space<vmem>>, vector<1x8x32xbf16>
    %51 = vector.shape_cast %50 : vector<1x8x32xbf16> to vector<8x32xbf16>
    %52 = vector.shape_cast %49 : vector<8x32xbf16> to vector<1x8x32xbf16>
    tpu.vector_store %arg8[%c7_20, %c0_21, %c0_22], %52 {strides = array<i32>} : memref<8x8x32xbf16, #tpu.memory_space<vmem>>, vector<1x8x32xbf16>,
    %53 = arith.truncf %42 : vector<8x64xf32> to vector<8x64xbf16>
    %cst_23 = arith.constant dense<0.000000e+00> : vector<8x256xf32>
    %54 = tpu.matmul %53, %3, %cst_23 {dimension_numbers = #tpu.dot_dimension_numbers<[1], [0], [0], [1], [0, 0, 1, 1], [], []>} : vector<8x64xbf16>, vector<64x256xbf16>, vector<8x256xf32> -> vector<8x256xf32>
    %c1 = arith.constant 1 : index
    %c0_24 = arith.constant 0 : index
    %c0_25 = arith.constant 0 : index
    %55 = vector.load %arg1[%c1, %c0_24, %c0_25] : memref<8x8x256xbf16, #tpu.memory_space<vmem>>, vector<1x8x256xbf16>
    %56 = vector.shape_cast %55 : vector<1x8x256xbf16> to vector<8x256xbf16>
    %c6 = arith.constant 6 : index
    %c0_26 = arith.constant 0 : index
    %c0_27 = arith.constant 0 : index
    %57 = vector.load %arg2[%c6, %c0_26, %c0_27] : memref<8x8x256xbf16, #tpu.memory_space<vmem>>, vector<1x8x256xbf16>
    %58 = vector.shape_cast %57 : vector<1x8x256xbf16> to vector<8x256xbf16>
    %59 = arith.select %6, %56, %58 : vector<8x256xi1>, vector<8x256xbf16>
    %60 = arith.extf %59 : vector<8x256xbf16> to vector<8x256xf32>
    %61 = arith.addf %54, %60 : vector<8x256xf32>
    %62 = vector.extract_strided_slice %61 {offsets = [0, 0], sizes = [8, 64], strides = [1, 1]} : vector<8x256xf32> to vector<8x64xf32>
    %63 = arith.negf %62 : vector<8x64xf32>
    %64 = math.exp %63 : vector<8x64xf32>
    %cst_28 = arith.constant 1.000000e+00 : f32
    %65 = vector.broadcast %cst_28 : f32 to vector<8x64xf32>
    %66 = arith.addf %65, %64 : vector<8x64xf32>
    %67 = arith.divf %65, %66 : vector<8x64xf32>
    %68 = vector.extract_strided_slice %61 {offsets = [0, 64], sizes = [8, 64], strides = [1, 1]} : vector<8x256xf32> to vector<8x64xf32>
    %69 = arith.negf %68 : vector<8x64xf32>
    %70 = math.exp %69 : vector<8x64xf32>
    %cst_29 = arith.constant 1.000000e+00 : f32
    %71 = vector.broadcast %cst_29 : f32 to vector<8x64xf32>
    %72 = arith.addf %71, %70 : vector<8x64xf32>
    %73 = arith.divf %71, %72 : vector<8x64xf32>
    %74 = vector.extract_strided_slice %61 {offsets = [0, 128], sizes = [8, 64], strides = [1, 1]} : vector<8x256xf32> to vector<8x64xf32>
    %75 = math.tanh %74 : vector<8x64xf32>
    %76 = vector.extract_strided_slice %61 {offsets = [0, 192], sizes = [8, 64], strides = [1, 1]} : vector<8x256xf32> to vector<8x64xf32>
    %77 = arith.negf %76 : vector<8x64xf32>
    %78 = math.exp %77 : vector<8x64xf32>
    %cst_30 = arith.constant 1.000000e+00 : f32
    %79 = vector.broadcast %cst_30 : f32 to vector<8x64xf32>
    %80 = arith.addf %79, %78 : vector<8x64xf32>
    %81 = arith.divf %79, %80 : vector<8x64xf32>
    %82 = arith.mulf %73, %40 : vector<8x64xf32>
    %83 = arith.mulf %67, %75 : vector<8x64xf32>
    %84 = arith.addf %82, %83 : vector<8x64xf32>
    %85 = math.tanh %84 : vector<8x64xf32>
    %86 = arith.mulf %81, %85 : vector<8x64xf32>
    %87 = vector.extract_strided_slice %86 {offsets = [0, 0], sizes = [8, 32], strides = [1, 1]} : vector<8x64xf32> to vector<8x32xf32>
    %88 = arith.truncf %87 : vector<8x32xf32> to vector<8x32xbf16>
    %c1_31 = arith.constant 1 : index
    %c0_32 = arith.constant 0 : index
    %c0_33 = arith.constant 0 : index
    %89 = vector.load %arg7[%c1_31, %c0_32, %c0_33] : memref<8x8x32xbf16, #tpu.memory_space<vmem>>, vector<1x8x32xbf16>
    %90 = vector.shape_cast %89 : vector<1x8x32xbf16> to vector<8x32xbf16>
    %91 = vector.shape_cast %88 : vector<8x32xbf16> to vector<1x8x32xbf16>
    tpu.vector_store %arg7[%c1_31, %c0_32, %c0_33], %91 {strides = array<i32>} : memref<8x8x32xbf16, #tpu.memory_space<vmem>>, vector<1x8x32xbf16>,
    %92 = vector.extract_strided_slice %86 {offsets = [0, 32], sizes = [8, 32], strides = [1, 1]} : vector<8x64xf32> to vector<8x32xf32>
    %93 = arith.truncf %92 : vector<8x32xf32> to vector<8x32xbf16>
    %c6_34 = arith.constant 6 : index
    %c0_35 = arith.constant 0 : index
    %c0_36 = arith.constant 0 : index
    %94 = vector.load %arg8[%c6_34, %c0_35, %c0_36] : memref<8x8x32xbf16, #tpu.memory_space<vmem>>, vector<1x8x32xbf16>
    %95 = vector.shape_cast %94 : vector<1x8x32xbf16> to vector<8x32xbf16>
    %96 = vector.shape_cast %93 : vector<8x32xbf16> to vector<1x8x32xbf16>
    tpu.vector_store %arg8[%c6_34, %c0_35, %c0_36], %96 {strides = array<i32>} : memref<8x8x32xbf16, #tpu.memory_space<vmem>>, vector<1x8x32xbf16>,
    %97 = arith.truncf %86 : vector<8x64xf32> to vector<8x64xbf16>
    %cst_37 = arith.constant dense<0.000000e+00> : vector<8x256xf32>
    %98 = tpu.matmul %97, %3, %cst_37 {dimension_numbers = #tpu.dot_dimension_numbers<[1], [0], [0], [1], [0, 0, 1, 1], [], []>} : vector<8x64xbf16>, vector<64x256xbf16>, vector<8x256xf32> -> vector<8x256xf32>
    %c2 = arith.constant 2 : index
    %c0_38 = arith.constant 0 : index
    %c0_39 = arith.constant 0 : index
    %99 = vector.load %arg1[%c2, %c0_38, %c0_39] : memref<8x8x256xbf16, #tpu.memory_space<vmem>>, vector<1x8x256xbf16>
    %100 = vector.shape_cast %99 : vector<1x8x256xbf16> to vector<8x256xbf16>
    %c5 = arith.constant 5 : index
    %c0_40 = arith.constant 0 : index
    %c0_41 = arith.constant 0 : index
    %101 = vector.load %arg2[%c5, %c0_40, %c0_41] : memref<8x8x256xbf16, #tpu.memory_space<vmem>>, vector<1x8x256xbf16>
    %102 = vector.shape_cast %101 : vector<1x8x256xbf16> to vector<8x256xbf16>
    %103 = arith.select %6, %100, %102 : vector<8x256xi1>, vector<8x256xbf16>
    %104 = arith.extf %103 : vector<8x256xbf16> to vector<8x256xf32>
    %105 = arith.addf %98, %104 : vector<8x256xf32>
    %106 = vector.extract_strided_slice %105 {offsets = [0, 0], sizes = [8, 64], strides = [1, 1]} : vector<8x256xf32> to vector<8x64xf32>
    %107 = arith.negf %106 : vector<8x64xf32>
    %108 = math.exp %107 : vector<8x64xf32>
    %cst_42 = arith.constant 1.000000e+00 : f32
    %109 = vector.broadcast %cst_42 : f32 to vector<8x64xf32>
    %110 = arith.addf %109, %108 : vector<8x64xf32>
    %111 = arith.divf %109, %110 : vector<8x64xf32>
    %112 = vector.extract_strided_slice %105 {offsets = [0, 64], sizes = [8, 64], strides = [1, 1]} : vector<8x256xf32> to vector<8x64xf32>
    %113 = arith.negf %112 : vector<8x64xf32>
    %114 = math.exp %113 : vector<8x64xf32>
    %cst_43 = arith.constant 1.000000e+00 : f32
    %115 = vector.broadcast %cst_43 : f32 to vector<8x64xf32>
    %116 = arith.addf %115, %114 : vector<8x64xf32>
    %117 = arith.divf %115, %116 : vector<8x64xf32>
    %118 = vector.extract_strided_slice %105 {offsets = [0, 128], sizes = [8, 64], strides = [1, 1]} : vector<8x256xf32> to vector<8x64xf32>
    %119 = math.tanh %118 : vector<8x64xf32>
    %120 = vector.extract_strided_slice %105 {offsets = [0, 192], sizes = [8, 64], strides = [1, 1]} : vector<8x256xf32> to vector<8x64xf32>
    %121 = arith.negf %120 : vector<8x64xf32>
    %122 = math.exp %121 : vector<8x64xf32>
    %cst_44 = arith.constant 1.000000e+00 : f32
    %123 = vector.broadcast %cst_44 : f32 to vector<8x64xf32>
    %124 = arith.addf %123, %122 : vector<8x64xf32>
    %125 = arith.divf %123, %124 : vector<8x64xf32>
    %126 = arith.mulf %117, %84 : vector<8x64xf32>
    %127 = arith.mulf %111, %119 : vector<8x64xf32>
    %128 = arith.addf %126, %127 : vector<8x64xf32>
    %129 = math.tanh %128 : vector<8x64xf32>
    %130 = arith.mulf %125, %129 : vector<8x64xf32>
    %131 = vector.extract_strided_slice %130 {offsets = [0, 0], sizes = [8, 32], strides = [1, 1]} : vector<8x64xf32> to vector<8x32xf32>
    %132 = arith.truncf %131 : vector<8x32xf32> to vector<8x32xbf16>
    %c2_45 = arith.constant 2 : index
    %c0_46 = arith.constant 0 : index
    %c0_47 = arith.constant 0 : index
    %133 = vector.load %arg7[%c2_45, %c0_46, %c0_47] : memref<8x8x32xbf16, #tpu.memory_space<vmem>>, vector<1x8x32xbf16>
    %134 = vector.shape_cast %133 : vector<1x8x32xbf16> to vector<8x32xbf16>
    %135 = vector.shape_cast %132 : vector<8x32xbf16> to vector<1x8x32xbf16>
    tpu.vector_store %arg7[%c2_45, %c0_46, %c0_47], %135 {strides = array<i32>} : memref<8x8x32xbf16, #tpu.memory_space<vmem>>, vector<1x8x32xbf16>,
    %136 = vector.extract_strided_slice %130 {offsets = [0, 32], sizes = [8, 32], strides = [1, 1]} : vector<8x64xf32> to vector<8x32xf32>
    %137 = arith.truncf %136 : vector<8x32xf32> to vector<8x32xbf16>
    %c5_48 = arith.constant 5 : index
    %c0_49 = arith.constant 0 : index
    %c0_50 = arith.constant 0 : index
    %138 = vector.load %arg8[%c5_48, %c0_49, %c0_50] : memref<8x8x32xbf16, #tpu.memory_space<vmem>>, vector<1x8x32xbf16>
    %139 = vector.shape_cast %138 : vector<1x8x32xbf16> to vector<8x32xbf16>
    %140 = vector.shape_cast %137 : vector<8x32xbf16> to vector<1x8x32xbf16>
    tpu.vector_store %arg8[%c5_48, %c0_49, %c0_50], %140 {strides = array<i32>} : memref<8x8x32xbf16, #tpu.memory_space<vmem>>, vector<1x8x32xbf16>,
    %141 = arith.truncf %130 : vector<8x64xf32> to vector<8x64xbf16>
    %cst_51 = arith.constant dense<0.000000e+00> : vector<8x256xf32>
    %142 = tpu.matmul %141, %3, %cst_51 {dimension_numbers = #tpu.dot_dimension_numbers<[1], [0], [0], [1], [0, 0, 1, 1], [], []>} : vector<8x64xbf16>, vector<64x256xbf16>, vector<8x256xf32> -> vector<8x256xf32>
    %c3 = arith.constant 3 : index
    %c0_52 = arith.constant 0 : index
    %c0_53 = arith.constant 0 : index
    %143 = vector.load %arg1[%c3, %c0_52, %c0_53] : memref<8x8x256xbf16, #tpu.memory_space<vmem>>, vector<1x8x256xbf16>
    %144 = vector.shape_cast %143 : vector<1x8x256xbf16> to vector<8x256xbf16>
    %c4 = arith.constant 4 : index
    %c0_54 = arith.constant 0 : index
    %c0_55 = arith.constant 0 : index
    %145 = vector.load %arg2[%c4, %c0_54, %c0_55] : memref<8x8x256xbf16, #tpu.memory_space<vmem>>, vector<1x8x256xbf16>
    %146 = vector.shape_cast %145 : vector<1x8x256xbf16> to vector<8x256xbf16>
    %147 = arith.select %6, %144, %146 : vector<8x256xi1>, vector<8x256xbf16>
    %148 = arith.extf %147 : vector<8x256xbf16> to vector<8x256xf32>
    %149 = arith.addf %142, %148 : vector<8x256xf32>
    %150 = vector.extract_strided_slice %149 {offsets = [0, 0], sizes = [8, 64], strides = [1, 1]} : vector<8x256xf32> to vector<8x64xf32>
    %151 = arith.negf %150 : vector<8x64xf32>
    %152 = math.exp %151 : vector<8x64xf32>
    %cst_56 = arith.constant 1.000000e+00 : f32
    %153 = vector.broadcast %cst_56 : f32 to vector<8x64xf32>
    %154 = arith.addf %153, %152 : vector<8x64xf32>
    %155 = arith.divf %153, %154 : vector<8x64xf32>
    %156 = vector.extract_strided_slice %149 {offsets = [0, 64], sizes = [8, 64], strides = [1, 1]} : vector<8x256xf32> to vector<8x64xf32>
    %157 = arith.negf %156 : vector<8x64xf32>
    %158 = math.exp %157 : vector<8x64xf32>
    %cst_57 = arith.constant 1.000000e+00 : f32
    %159 = vector.broadcast %cst_57 : f32 to vector<8x64xf32>
    %160 = arith.addf %159, %158 : vector<8x64xf32>
    %161 = arith.divf %159, %160 : vector<8x64xf32>
    %162 = vector.extract_strided_slice %149 {offsets = [0, 128], sizes = [8, 64], strides = [1, 1]} : vector<8x256xf32> to vector<8x64xf32>
    %163 = math.tanh %162 : vector<8x64xf32>
    %164 = vector.extract_strided_slice %149 {offsets = [0, 192], sizes = [8, 64], strides = [1, 1]} : vector<8x256xf32> to vector<8x64xf32>
    %165 = arith.negf %164 : vector<8x64xf32>
    %166 = math.exp %165 : vector<8x64xf32>
    %cst_58 = arith.constant 1.000000e+00 : f32
    %167 = vector.broadcast %cst_58 : f32 to vector<8x64xf32>
    %168 = arith.addf %167, %166 : vector<8x64xf32>
    %169 = arith.divf %167, %168 : vector<8x64xf32>
    %170 = arith.mulf %161, %128 : vector<8x64xf32>
    %171 = arith.mulf %155, %163 : vector<8x64xf32>
    %172 = arith.addf %170, %171 : vector<8x64xf32>
    %173 = math.tanh %172 : vector<8x64xf32>
    %174 = arith.mulf %169, %173 : vector<8x64xf32>
    %175 = vector.extract_strided_slice %174 {offsets = [0, 0], sizes = [8, 32], strides = [1, 1]} : vector<8x64xf32> to vector<8x32xf32>
    %176 = arith.truncf %175 : vector<8x32xf32> to vector<8x32xbf16>
    %c3_59 = arith.constant 3 : index
    %c0_60 = arith.constant 0 : index
    %c0_61 = arith.constant 0 : index
    %177 = vector.load %arg7[%c3_59, %c0_60, %c0_61] : memref<8x8x32xbf16, #tpu.memory_space<vmem>>, vector<1x8x32xbf16>
    %178 = vector.shape_cast %177 : vector<1x8x32xbf16> to vector<8x32xbf16>
    %179 = vector.shape_cast %176 : vector<8x32xbf16> to vector<1x8x32xbf16>
    tpu.vector_store %arg7[%c3_59, %c0_60, %c0_61], %179 {strides = array<i32>} : memref<8x8x32xbf16, #tpu.memory_space<vmem>>, vector<1x8x32xbf16>,
    %180 = vector.extract_strided_slice %174 {offsets = [0, 32], sizes = [8, 32], strides = [1, 1]} : vector<8x64xf32> to vector<8x32xf32>
    %181 = arith.truncf %180 : vector<8x32xf32> to vector<8x32xbf16>
    %c4_62 = arith.constant 4 : index
    %c0_63 = arith.constant 0 : index
    %c0_64 = arith.constant 0 : index
    %182 = vector.load %arg8[%c4_62, %c0_63, %c0_64] : memref<8x8x32xbf16, #tpu.memory_space<vmem>>, vector<1x8x32xbf16>
    %183 = vector.shape_cast %182 : vector<1x8x32xbf16> to vector<8x32xbf16>
    %184 = vector.shape_cast %181 : vector<8x32xbf16> to vector<1x8x32xbf16>
    tpu.vector_store %arg8[%c4_62, %c0_63, %c0_64], %184 {strides = array<i32>} : memref<8x8x32xbf16, #tpu.memory_space<vmem>>, vector<1x8x32xbf16>,
    %185 = arith.truncf %174 : vector<8x64xf32> to vector<8x64xbf16>
    %cst_65 = arith.constant dense<0.000000e+00> : vector<8x256xf32>
    %186 = tpu.matmul %185, %3, %cst_65 {dimension_numbers = #tpu.dot_dimension_numbers<[1], [0], [0], [1], [0, 0, 1, 1], [], []>} : vector<8x64xbf16>, vector<64x256xbf16>, vector<8x256xf32> -> vector<8x256xf32>
    %c4_66 = arith.constant 4 : index
    %c0_67 = arith.constant 0 : index
    %c0_68 = arith.constant 0 : index
    %187 = vector.load %arg1[%c4_66, %c0_67, %c0_68] : memref<8x8x256xbf16, #tpu.memory_space<vmem>>, vector<1x8x256xbf16>
    %188 = vector.shape_cast %187 : vector<1x8x256xbf16> to vector<8x256xbf16>
    %c3_69 = arith.constant 3 : index
    %c0_70 = arith.constant 0 : index
    %c0_71 = arith.constant 0 : index
    %189 = vector.load %arg2[%c3_69, %c0_70, %c0_71] : memref<8x8x256xbf16, #tpu.memory_space<vmem>>, vector<1x8x256xbf16>
    %190 = vector.shape_cast %189 : vector<1x8x256xbf16> to vector<8x256xbf16>
    %191 = arith.select %6, %188, %190 : vector<8x256xi1>, vector<8x256xbf16>
    %192 = arith.extf %191 : vector<8x256xbf16> to vector<8x256xf32>
    %193 = arith.addf %186, %192 : vector<8x256xf32>
    %194 = vector.extract_strided_slice %193 {offsets = [0, 0], sizes = [8, 64], strides = [1, 1]} : vector<8x256xf32> to vector<8x64xf32>
    %195 = arith.negf %194 : vector<8x64xf32>
    %196 = math.exp %195 : vector<8x64xf32>
    %cst_72 = arith.constant 1.000000e+00 : f32
    %197 = vector.broadcast %cst_72 : f32 to vector<8x64xf32>
    %198 = arith.addf %197, %196 : vector<8x64xf32>
    %199 = arith.divf %197, %198 : vector<8x64xf32>
    %200 = vector.extract_strided_slice %193 {offsets = [0, 64], sizes = [8, 64], strides = [1, 1]} : vector<8x256xf32> to vector<8x64xf32>
    %201 = arith.negf %200 : vector<8x64xf32>
    %202 = math.exp %201 : vector<8x64xf32>
    %cst_73 = arith.constant 1.000000e+00 : f32
    %203 = vector.broadcast %cst_73 : f32 to vector<8x64xf32>
    %204 = arith.addf %203, %202 : vector<8x64xf32>
    %205 = arith.divf %203, %204 : vector<8x64xf32>
    %206 = vector.extract_strided_slice %193 {offsets = [0, 128], sizes = [8, 64], strides = [1, 1]} : vector<8x256xf32> to vector<8x64xf32>
    %207 = math.tanh %206 : vector<8x64xf32>
    %208 = vector.extract_strided_slice %193 {offsets = [0, 192], sizes = [8, 64], strides = [1, 1]} : vector<8x256xf32> to vector<8x64xf32>
    %209 = arith.negf %208 : vector<8x64xf32>
    %210 = math.exp %209 : vector<8x64xf32>
    %cst_74 = arith.constant 1.000000e+00 : f32
    %211 = vector.broadcast %cst_74 : f32 to vector<8x64xf32>
    %212 = arith.addf %211, %210 : vector<8x64xf32>
    %213 = arith.divf %211, %212 : vector<8x64xf32>
    %214 = arith.mulf %205, %172 : vector<8x64xf32>
    %215 = arith.mulf %199, %207 : vector<8x64xf32>
    %216 = arith.addf %214, %215 : vector<8x64xf32>
    %217 = math.tanh %216 : vector<8x64xf32>
    %218 = arith.mulf %213, %217 : vector<8x64xf32>
    %219 = vector.extract_strided_slice %218 {offsets = [0, 0], sizes = [8, 32], strides = [1, 1]} : vector<8x64xf32> to vector<8x32xf32>
    %220 = arith.truncf %219 : vector<8x32xf32> to vector<8x32xbf16>
    %c4_75 = arith.constant 4 : index
    %c0_76 = arith.constant 0 : index
    %c0_77 = arith.constant 0 : index
    %221 = vector.load %arg7[%c4_75, %c0_76, %c0_77] : memref<8x8x32xbf16, #tpu.memory_space<vmem>>, vector<1x8x32xbf16>
    %222 = vector.shape_cast %221 : vector<1x8x32xbf16> to vector<8x32xbf16>
    %223 = vector.shape_cast %220 : vector<8x32xbf16> to vector<1x8x32xbf16>
    tpu.vector_store %arg7[%c4_75, %c0_76, %c0_77], %223 {strides = array<i32>} : memref<8x8x32xbf16, #tpu.memory_space<vmem>>, vector<1x8x32xbf16>,
    %224 = vector.extract_strided_slice %218 {offsets = [0, 32], sizes = [8, 32], strides = [1, 1]} : vector<8x64xf32> to vector<8x32xf32>
    %225 = arith.truncf %224 : vector<8x32xf32> to vector<8x32xbf16>
    %c3_78 = arith.constant 3 : index
    %c0_79 = arith.constant 0 : index
    %c0_80 = arith.constant 0 : index
    %226 = vector.load %arg8[%c3_78, %c0_79, %c0_80] : memref<8x8x32xbf16, #tpu.memory_space<vmem>>, vector<1x8x32xbf16>
    %227 = vector.shape_cast %226 : vector<1x8x32xbf16> to vector<8x32xbf16>
    %228 = vector.shape_cast %225 : vector<8x32xbf16> to vector<1x8x32xbf16>
    tpu.vector_store %arg8[%c3_78, %c0_79, %c0_80], %228 {strides = array<i32>} : memref<8x8x32xbf16, #tpu.memory_space<vmem>>, vector<1x8x32xbf16>,
    %229 = arith.truncf %218 : vector<8x64xf32> to vector<8x64xbf16>
    %cst_81 = arith.constant dense<0.000000e+00> : vector<8x256xf32>
    %230 = tpu.matmul %229, %3, %cst_81 {dimension_numbers = #tpu.dot_dimension_numbers<[1], [0], [0], [1], [0, 0, 1, 1], [], []>} : vector<8x64xbf16>, vector<64x256xbf16>, vector<8x256xf32> -> vector<8x256xf32>
    %c5_82 = arith.constant 5 : index
    %c0_83 = arith.constant 0 : index
    %c0_84 = arith.constant 0 : index
    %231 = vector.load %arg1[%c5_82, %c0_83, %c0_84] : memref<8x8x256xbf16, #tpu.memory_space<vmem>>, vector<1x8x256xbf16>
    %232 = vector.shape_cast %231 : vector<1x8x256xbf16> to vector<8x256xbf16>
    %c2_85 = arith.constant 2 : index
    %c0_86 = arith.constant 0 : index
    %c0_87 = arith.constant 0 : index
    %233 = vector.load %arg2[%c2_85, %c0_86, %c0_87] : memref<8x8x256xbf16, #tpu.memory_space<vmem>>, vector<1x8x256xbf16>
    %234 = vector.shape_cast %233 : vector<1x8x256xbf16> to vector<8x256xbf16>
    %235 = arith.select %6, %232, %234 : vector<8x256xi1>, vector<8x256xbf16>
    %236 = arith.extf %235 : vector<8x256xbf16> to vector<8x256xf32>
    %237 = arith.addf %230, %236 : vector<8x256xf32>
    %238 = vector.extract_strided_slice %237 {offsets = [0, 0], sizes = [8, 64], strides = [1, 1]} : vector<8x256xf32> to vector<8x64xf32>
    %239 = arith.negf %238 : vector<8x64xf32>
    %240 = math.exp %239 : vector<8x64xf32>
    %cst_88 = arith.constant 1.000000e+00 : f32
    %241 = vector.broadcast %cst_88 : f32 to vector<8x64xf32>
    %242 = arith.addf %241, %240 : vector<8x64xf32>
    %243 = arith.divf %241, %242 : vector<8x64xf32>
    %244 = vector.extract_strided_slice %237 {offsets = [0, 64], sizes = [8, 64], strides = [1, 1]} : vector<8x256xf32> to vector<8x64xf32>
    %245 = arith.negf %244 : vector<8x64xf32>
    %246 = math.exp %245 : vector<8x64xf32>
    %cst_89 = arith.constant 1.000000e+00 : f32
    %247 = vector.broadcast %cst_89 : f32 to vector<8x64xf32>
    %248 = arith.addf %247, %246 : vector<8x64xf32>
    %249 = arith.divf %247, %248 : vector<8x64xf32>
    %250 = vector.extract_strided_slice %237 {offsets = [0, 128], sizes = [8, 64], strides = [1, 1]} : vector<8x256xf32> to vector<8x64xf32>
    %251 = math.tanh %250 : vector<8x64xf32>
    %252 = vector.extract_strided_slice %237 {offsets = [0, 192], sizes = [8, 64], strides = [1, 1]} : vector<8x256xf32> to vector<8x64xf32>
    %253 = arith.negf %252 : vector<8x64xf32>
    %254 = math.exp %253 : vector<8x64xf32>
    %cst_90 = arith.constant 1.000000e+00 : f32
    %255 = vector.broadcast %cst_90 : f32 to vector<8x64xf32>
    %256 = arith.addf %255, %254 : vector<8x64xf32>
    %257 = arith.divf %255, %256 : vector<8x64xf32>
    %258 = arith.mulf %249, %216 : vector<8x64xf32>
    %259 = arith.mulf %243, %251 : vector<8x64xf32>
    %260 = arith.addf %258, %259 : vector<8x64xf32>
    %261 = math.tanh %260 : vector<8x64xf32>
    %262 = arith.mulf %257, %261 : vector<8x64xf32>
    %263 = vector.extract_strided_slice %262 {offsets = [0, 0], sizes = [8, 32], strides = [1, 1]} : vector<8x64xf32> to vector<8x32xf32>
    %264 = arith.truncf %263 : vector<8x32xf32> to vector<8x32xbf16>
    %c5_91 = arith.constant 5 : index
    %c0_92 = arith.constant 0 : index
    %c0_93 = arith.constant 0 : index
    %265 = vector.load %arg7[%c5_91, %c0_92, %c0_93] : memref<8x8x32xbf16, #tpu.memory_space<vmem>>, vector<1x8x32xbf16>
    %266 = vector.shape_cast %265 : vector<1x8x32xbf16> to vector<8x32xbf16>
    %267 = vector.shape_cast %264 : vector<8x32xbf16> to vector<1x8x32xbf16>
    tpu.vector_store %arg7[%c5_91, %c0_92, %c0_93], %267 {strides = array<i32>} : memref<8x8x32xbf16, #tpu.memory_space<vmem>>, vector<1x8x32xbf16>,
    %268 = vector.extract_strided_slice %262 {offsets = [0, 32], sizes = [8, 32], strides = [1, 1]} : vector<8x64xf32> to vector<8x32xf32>
    %269 = arith.truncf %268 : vector<8x32xf32> to vector<8x32xbf16>
    %c2_94 = arith.constant 2 : index
    %c0_95 = arith.constant 0 : index
    %c0_96 = arith.constant 0 : index
    %270 = vector.load %arg8[%c2_94, %c0_95, %c0_96] : memref<8x8x32xbf16, #tpu.memory_space<vmem>>, vector<1x8x32xbf16>
    %271 = vector.shape_cast %270 : vector<1x8x32xbf16> to vector<8x32xbf16>
    %272 = vector.shape_cast %269 : vector<8x32xbf16> to vector<1x8x32xbf16>
    tpu.vector_store %arg8[%c2_94, %c0_95, %c0_96], %272 {strides = array<i32>} : memref<8x8x32xbf16, #tpu.memory_space<vmem>>, vector<1x8x32xbf16>,
    %273 = arith.truncf %262 : vector<8x64xf32> to vector<8x64xbf16>
    %cst_97 = arith.constant dense<0.000000e+00> : vector<8x256xf32>
    %274 = tpu.matmul %273, %3, %cst_97 {dimension_numbers = #tpu.dot_dimension_numbers<[1], [0], [0], [1], [0, 0, 1, 1], [], []>} : vector<8x64xbf16>, vector<64x256xbf16>, vector<8x256xf32> -> vector<8x256xf32>
    %c6_98 = arith.constant 6 : index
    %c0_99 = arith.constant 0 : index
    %c0_100 = arith.constant 0 : index
    %275 = vector.load %arg1[%c6_98, %c0_99, %c0_100] : memref<8x8x256xbf16, #tpu.memory_space<vmem>>, vector<1x8x256xbf16>
    %276 = vector.shape_cast %275 : vector<1x8x256xbf16> to vector<8x256xbf16>
    %c1_101 = arith.constant 1 : index
    %c0_102 = arith.constant 0 : index
    %c0_103 = arith.constant 0 : index
    %277 = vector.load %arg2[%c1_101, %c0_102, %c0_103] : memref<8x8x256xbf16, #tpu.memory_space<vmem>>, vector<1x8x256xbf16>
    %278 = vector.shape_cast %277 : vector<1x8x256xbf16> to vector<8x256xbf16>
    %279 = arith.select %6, %276, %278 : vector<8x256xi1>, vector<8x256xbf16>
    %280 = arith.extf %279 : vector<8x256xbf16> to vector<8x256xf32>
    %281 = arith.addf %274, %280 : vector<8x256xf32>
    %282 = vector.extract_strided_slice %281 {offsets = [0, 0], sizes = [8, 64], strides = [1, 1]} : vector<8x256xf32> to vector<8x64xf32>
    %283 = arith.negf %282 : vector<8x64xf32>
    %284 = math.exp %283 : vector<8x64xf32>
    %cst_104 = arith.constant 1.000000e+00 : f32
    %285 = vector.broadcast %cst_104 : f32 to vector<8x64xf32>
    %286 = arith.addf %285, %284 : vector<8x64xf32>
    %287 = arith.divf %285, %286 : vector<8x64xf32>
    %288 = vector.extract_strided_slice %281 {offsets = [0, 64], sizes = [8, 64], strides = [1, 1]} : vector<8x256xf32> to vector<8x64xf32>
    %289 = arith.negf %288 : vector<8x64xf32>
    %290 = math.exp %289 : vector<8x64xf32>
    %cst_105 = arith.constant 1.000000e+00 : f32
    %291 = vector.broadcast %cst_105 : f32 to vector<8x64xf32>
    %292 = arith.addf %291, %290 : vector<8x64xf32>
    %293 = arith.divf %291, %292 : vector<8x64xf32>
    %294 = vector.extract_strided_slice %281 {offsets = [0, 128], sizes = [8, 64], strides = [1, 1]} : vector<8x256xf32> to vector<8x64xf32>
    %295 = math.tanh %294 : vector<8x64xf32>
    %296 = vector.extract_strided_slice %281 {offsets = [0, 192], sizes = [8, 64], strides = [1, 1]} : vector<8x256xf32> to vector<8x64xf32>
    %297 = arith.negf %296 : vector<8x64xf32>
    %298 = math.exp %297 : vector<8x64xf32>
    %cst_106 = arith.constant 1.000000e+00 : f32
    %299 = vector.broadcast %cst_106 : f32 to vector<8x64xf32>
    %300 = arith.addf %299, %298 : vector<8x64xf32>
    %301 = arith.divf %299, %300 : vector<8x64xf32>
    %302 = arith.mulf %293, %260 : vector<8x64xf32>
    %303 = arith.mulf %287, %295 : vector<8x64xf32>
    %304 = arith.addf %302, %303 : vector<8x64xf32>
    %305 = math.tanh %304 : vector<8x64xf32>
    %306 = arith.mulf %301, %305 : vector<8x64xf32>
    %307 = vector.extract_strided_slice %306 {offsets = [0, 0], sizes = [8, 32], strides = [1, 1]} : vector<8x64xf32> to vector<8x32xf32>
    %308 = arith.truncf %307 : vector<8x32xf32> to vector<8x32xbf16>
    %c6_107 = arith.constant 6 : index
    %c0_108 = arith.constant 0 : index
    %c0_109 = arith.constant 0 : index
    %309 = vector.load %arg7[%c6_107, %c0_108, %c0_109] : memref<8x8x32xbf16, #tpu.memory_space<vmem>>, vector<1x8x32xbf16>
    %310 = vector.shape_cast %309 : vector<1x8x32xbf16> to vector<8x32xbf16>
    %311 = vector.shape_cast %308 : vector<8x32xbf16> to vector<1x8x32xbf16>
    tpu.vector_store %arg7[%c6_107, %c0_108, %c0_109], %311 {strides = array<i32>} : memref<8x8x32xbf16, #tpu.memory_space<vmem>>, vector<1x8x32xbf16>,
    %312 = vector.extract_strided_slice %306 {offsets = [0, 32], sizes = [8, 32], strides = [1, 1]} : vector<8x64xf32> to vector<8x32xf32>
    %313 = arith.truncf %312 : vector<8x32xf32> to vector<8x32xbf16>
    %c1_110 = arith.constant 1 : index
    %c0_111 = arith.constant 0 : index
    %c0_112 = arith.constant 0 : index
    %314 = vector.load %arg8[%c1_110, %c0_111, %c0_112] : memref<8x8x32xbf16, #tpu.memory_space<vmem>>, vector<1x8x32xbf16>
    %315 = vector.shape_cast %314 : vector<1x8x32xbf16> to vector<8x32xbf16>
    %316 = vector.shape_cast %313 : vector<8x32xbf16> to vector<1x8x32xbf16>
    tpu.vector_store %arg8[%c1_110, %c0_111, %c0_112], %316 {strides = array<i32>} : memref<8x8x32xbf16, #tpu.memory_space<vmem>>, vector<1x8x32xbf16>,
    %317 = arith.truncf %306 : vector<8x64xf32> to vector<8x64xbf16>
    %cst_113 = arith.constant dense<0.000000e+00> : vector<8x256xf32>
    %318 = tpu.matmul %317, %3, %cst_113 {dimension_numbers = #tpu.dot_dimension_numbers<[1], [0], [0], [1], [0, 0, 1, 1], [], []>} : vector<8x64xbf16>, vector<64x256xbf16>, vector<8x256xf32> -> vector<8x256xf32>
    %c7_114 = arith.constant 7 : index
    %c0_115 = arith.constant 0 : index
    %c0_116 = arith.constant 0 : index
    %319 = vector.load %arg1[%c7_114, %c0_115, %c0_116] : memref<8x8x256xbf16, #tpu.memory_space<vmem>>, vector<1x8x256xbf16>
    %320 = vector.shape_cast %319 : vector<1x8x256xbf16> to vector<8x256xbf16>
    %c0_117 = arith.constant 0 : index
    %c0_118 = arith.constant 0 : index
    %c0_119 = arith.constant 0 : index
    %321 = vector.load %arg2[%c0_117, %c0_118, %c0_119] : memref<8x8x256xbf16, #tpu.memory_space<vmem>>, vector<1x8x256xbf16>
    %322 = vector.shape_cast %321 : vector<1x8x256xbf16> to vector<8x256xbf16>
    %323 = arith.select %6, %320, %322 : vector<8x256xi1>, vector<8x256xbf16>
    %324 = arith.extf %323 : vector<8x256xbf16> to vector<8x256xf32>
    %325 = arith.addf %318, %324 : vector<8x256xf32>
    %326 = vector.extract_strided_slice %325 {offsets = [0, 0], sizes = [8, 64], strides = [1, 1]} : vector<8x256xf32> to vector<8x64xf32>
    %327 = arith.negf %326 : vector<8x64xf32>
    %328 = math.exp %327 : vector<8x64xf32>
    %cst_120 = arith.constant 1.000000e+00 : f32
    %329 = vector.broadcast %cst_120 : f32 to vector<8x64xf32>
    %330 = arith.addf %329, %328 : vector<8x64xf32>
    %331 = arith.divf %329, %330 : vector<8x64xf32>
    %332 = vector.extract_strided_slice %325 {offsets = [0, 64], sizes = [8, 64], strides = [1, 1]} : vector<8x256xf32> to vector<8x64xf32>
    %333 = arith.negf %332 : vector<8x64xf32>
    %334 = math.exp %333 : vector<8x64xf32>
    %cst_121 = arith.constant 1.000000e+00 : f32
    %335 = vector.broadcast %cst_121 : f32 to vector<8x64xf32>
    %336 = arith.addf %335, %334 : vector<8x64xf32>
    %337 = arith.divf %335, %336 : vector<8x64xf32>
    %338 = vector.extract_strided_slice %325 {offsets = [0, 128], sizes = [8, 64], strides = [1, 1]} : vector<8x256xf32> to vector<8x64xf32>
    %339 = math.tanh %338 : vector<8x64xf32>
    %340 = vector.extract_strided_slice %325 {offsets = [0, 192], sizes = [8, 64], strides = [1, 1]} : vector<8x256xf32> to vector<8x64xf32>
    %341 = arith.negf %340 : vector<8x64xf32>
    %342 = math.exp %341 : vector<8x64xf32>
    %cst_122 = arith.constant 1.000000e+00 : f32
    %343 = vector.broadcast %cst_122 : f32 to vector<8x64xf32>
    %344 = arith.addf %343, %342 : vector<8x64xf32>
    %345 = arith.divf %343, %344 : vector<8x64xf32>
    %346 = arith.mulf %337, %304 : vector<8x64xf32>
    %347 = arith.mulf %331, %339 : vector<8x64xf32>
    %348 = arith.addf %346, %347 : vector<8x64xf32>
    %349 = math.tanh %348 : vector<8x64xf32>
    %350 = arith.mulf %345, %349 : vector<8x64xf32>
    %351 = vector.extract_strided_slice %350 {offsets = [0, 0], sizes = [8, 32], strides = [1, 1]} : vector<8x64xf32> to vector<8x32xf32>
    %352 = arith.truncf %351 : vector<8x32xf32> to vector<8x32xbf16>
    %c7_123 = arith.constant 7 : index
    %c0_124 = arith.constant 0 : index
    %c0_125 = arith.constant 0 : index
    %353 = vector.load %arg7[%c7_123, %c0_124, %c0_125] : memref<8x8x32xbf16, #tpu.memory_space<vmem>>, vector<1x8x32xbf16>
    %354 = vector.shape_cast %353 : vector<1x8x32xbf16> to vector<8x32xbf16>
    %355 = vector.shape_cast %352 : vector<8x32xbf16> to vector<1x8x32xbf16>
    tpu.vector_store %arg7[%c7_123, %c0_124, %c0_125], %355 {strides = array<i32>} : memref<8x8x32xbf16, #tpu.memory_space<vmem>>, vector<1x8x32xbf16>,
    %356 = vector.extract_strided_slice %350 {offsets = [0, 32], sizes = [8, 32], strides = [1, 1]} : vector<8x64xf32> to vector<8x32xf32>
    %357 = arith.truncf %356 : vector<8x32xf32> to vector<8x32xbf16>
    %c0_126 = arith.constant 0 : index
    %c0_127 = arith.constant 0 : index
    %c0_128 = arith.constant 0 : index
    %358 = vector.load %arg8[%c0_126, %c0_127, %c0_128] : memref<8x8x32xbf16, #tpu.memory_space<vmem>>, vector<1x8x32xbf16>
    %359 = vector.shape_cast %358 : vector<1x8x32xbf16> to vector<8x32xbf16>
    %360 = vector.shape_cast %357 : vector<8x32xbf16> to vector<1x8x32xbf16>
    tpu.vector_store %arg8[%c0_126, %c0_127, %c0_128], %360 {strides = array<i32>} : memref<8x8x32xbf16, #tpu.memory_space<vmem>>, vector<1x8x32xbf16>,
    %c0_129 = arith.constant 0 : index
    %c0_130 = arith.constant 0 : index
    %361 = vector.load %arg11[%c0_129, %c0_130] : memref<8x64xf32, #tpu.memory_space<vmem>>, vector<8x64xf32>
    tpu.vector_store %arg11[%c0_129, %c0_130], %350 {strides = array<i32>} : memref<8x64xf32, #tpu.memory_space<vmem>>, vector<8x64xf32>,
    %c0_131 = arith.constant 0 : index
    %c0_132 = arith.constant 0 : index
    %362 = vector.load %arg12[%c0_131, %c0_132] : memref<8x64xf32, #tpu.memory_space<vmem>>, vector<8x64xf32>
    tpu.vector_store %arg12[%c0_131, %c0_132], %348 {strides = array<i32>} : memref<8x64xf32, #tpu.memory_space<vmem>>, vector<8x64xf32>,
    %c0_133 = arith.constant 0 : index
    %c0_134 = arith.constant 0 : index
    %363 = vector.load %arg9[%c0_133, %c0_134] : memref<8x64xf32, #tpu.memory_space<vmem>>, vector<8x64xf32>
    tpu.vector_store %arg9[%c0_133, %c0_134], %350 {strides = array<i32>} : memref<8x64xf32, #tpu.memory_space<vmem>>, vector<8x64xf32>,
    %c0_135 = arith.constant 0 : index
    %c0_136 = arith.constant 0 : index
    %364 = vector.load %arg10[%c0_135, %c0_136] : memref<8x64xf32, #tpu.memory_space<vmem>>, vector<8x64xf32>
    tpu.vector_store %arg10[%c0_135, %c0_136], %348 {strides = array<i32>} : memref<8x64xf32, #tpu.memory_space<vmem>>, vector<8x64xf32>,
    return
  }
  func.func @transform_0(%arg0: i32) -> (i32, i32, i32) {
    %c0_i32 = arith.constant 0 : i32
    %c0_i32_0 = arith.constant 0 : i32
    %c0_i32_1 = arith.constant 0 : i32
    return %arg0, %c0_i32, %c0_i32_0 : i32, i32, i32
  }
  func.func @transform_1(%arg0: i32) -> (i32, i32, i32) {
    %c0_i32 = arith.constant 0 : i32
    %0 = arith.subi %c0_i32, %arg0 : i32
    %c0_i32_0 = arith.constant 0 : i32
    %c0_i32_1 = arith.constant 0 : i32
    %c0_i32_2 = arith.constant 0 : i32
    return %0, %c0_i32_0, %c0_i32_1 : i32, i32, i32
  }
  func.func @transform_2(%arg0: i32) -> (i32, i32) {
    %c0_i32 = arith.constant 0 : i32
    %c0_i32_0 = arith.constant 0 : i32
    %c0_i32_1 = arith.constant 0 : i32
    return %c0_i32, %c0_i32_0 : i32, i32
  }
  func.func @transform_3(%arg0: i32) -> (i32, i32) {
    %c0_i32 = arith.constant 0 : i32
    %c0_i32_0 = arith.constant 0 : i32
    %c0_i32_1 = arith.constant 0 : i32
    return %c0_i32, %c0_i32_0 : i32, i32
  }
  func.func @transform_4(%arg0: i32) -> (i32, i32) {
    %c0_i32 = arith.constant 0 : i32
    %c0_i32_0 = arith.constant 0 : i32
    %c0_i32_1 = arith.constant 0 : i32
    return %c0_i32, %c0_i32_0 : i32, i32
  }
  func.func @transform_5(%arg0: i32) -> (i32, i32) {
    %c0_i32 = arith.constant 0 : i32
    %c0_i32_0 = arith.constant 0 : i32
    %c0_i32_1 = arith.constant 0 : i32
    return %c0_i32, %c0_i32_0 : i32, i32
  }
  func.func @transform_6(%arg0: i32) -> (i32, i32, i32) {
    %c0_i32 = arith.constant 0 : i32
    %c0_i32_0 = arith.constant 0 : i32
    %c0_i32_1 = arith.constant 0 : i32
    return %arg0, %c0_i32, %c0_i32_0 : i32, i32, i32
  }
  func.func @transform_7(%arg0: i32) -> (i32, i32, i32) {
    %c0_i32 = arith.constant 0 : i32
    %0 = arith.subi %c0_i32, %arg0 : i32
    %c0_i32_0 = arith.constant 0 : i32
    %c0_i32_1 = arith.constant 0 : i32
    %c0_i32_2 = arith.constant 0 : i32
    return %0, %c0_i32_0, %c0_i32_1 : i32, i32, i32
  }
  func.func @transform_8(%arg0: i32) -> (i32, i32) {
    %c0_i32 = arith.constant 0 : i32
    %c0_i32_0 = arith.constant 0 : i32
    %c0_i32_1 = arith.constant 0 : i32
    return %c0_i32, %c0_i32_0 : i32, i32
  }
  func.func @transform_9(%arg0: i32) -> (i32, i32) {
    %c0_i32 = arith.constant 0 : i32
    %c0_i32_0 = arith.constant 0 : i32
    %c0_i32_1 = arith.constant 0 : i32
    return %c0_i32, %c0_i32_0 : i32, i32
  }
}

</mosaic_0001>

<llo_original>
// kernel: blstm_forward.5
$region0: #{blstm_forward.5}
  #allocation0 [shape = 'u32[]', space=smem, size = 0x4, offset = 0x4, fixed_abs, tag = 'smem constant byte address 0x4 - core index']
  #allocation1 [shape = 'u32[144,128]{1,0:T(1,128)}', space=vmem, size = 0x12000, scoped, tag = 'internal scratch']
  %s0 = inlined_call_operand.vmem [shape: bf16[64,32], index: 0, kind: input, shape index: {}]
  %s1 = inlined_call_operand.vmem [shape: bf16[32,256], index: 1, kind: input, shape index: {}]
  %s2 = inlined_call_operand.vmem [shape: f32[1,256], index: 2, kind: input, shape index: {}]
  %s3 = inlined_call_operand.vmem [shape: bf16[64,256], index: 3, kind: output, shape index: {}]
  %s4 = sld [smem:[#allocation0]]
  $region22: #{blstm_forward.5} parent=0
    _
  %s6 = ssub.s32 1, %s4
  %s7 = scalar_select 0, %s6, %s4
  // Predicated region
  $region2: #{blstm_forward.5} parent=0 // pred_check
    _
  $region3: #{blstm_forward.5} parent=0 // pred_check_branch
    %9 = sbr.rel (0) target = $region5
  $region4: #{blstm_forward.5} parent=0 // pred_region
    _
  $region5: #{blstm_forward.5} parent=0 // pred_fallthru
    _
  // Predicated region
  $region6: #{blstm_forward.5} parent=0 // pred_check
    _
  $region7: #{blstm_forward.5} parent=0 // pred_check_branch
    %11 = sbr.rel (0) target = $region9
  $region8: #{blstm_forward.5} parent=0 // pred_region
    _
  $region9: #{blstm_forward.5} parent=0 // pred_fallthru
    _
  // Predicated region
  $region10: #{blstm_forward.5} parent=0 // pred_check
    _
  $region11: #{blstm_forward.5} parent=0 // pred_check_branch
    %13 = sbr.rel (0) target = $region13
  $region12: #{blstm_forward.5} parent=0 // pred_region
    _
  $region13: #{blstm_forward.5} parent=0 // pred_fallthru
    _
  %v15 = vld [vmem:[%s0] sm:$0xf]
  %v16 = vld [vmem:[%s0 + $0x4] sm:$0xf]
  %v17 = vld [vmem:[%s0 + $0x8] sm:$0xf]
  %v18 = vld [vmem:[%s0 + $0xc] sm:$0xf]
  %v19 = vld [vmem:[%s0 + $0x10] sm:$0xf]
  %v20 = vld [vmem:[%s0 + $0x14] sm:$0xf]
  %v21 = vld [vmem:[%s0 + $0x18] sm:$0xf]
  %v22 = vld [vmem:[%s0 + $0x1c] sm:$0xf]
  %v23 = vld [vmem:[%s1] sm:$0xff]
  %v24 = vld [vmem:[%s1 + $0x8] sm:$0xff]
  %v25 = vld [vmem:[%s1 + $0x10] sm:$0xff]
  %v26 = vld [vmem:[%s1 + $0x18] sm:$0xff]
  %v27 = vld [vmem:[%s2] sm:$0x3]
  %v29 = vlaneseq
  %v30 = vshrl.u32 %v29, 7
  %v31 = vsub.s32 0, %v30
  %v32 = vrot.slane %v27, %v31
  %v33 = vlaneseq
  %v34 = vshrl.u32 %v33, 7
  %v35 = vsub.s32 1, %v34
  %v36 = vrot.slane %v27, %v35
  %v47 = vunpack.c.l.b16 %v15
  %v48 = vunpack.c.l.b16 %v16
  %v49 = vunpack.c.l.b16 %v17
  %v50 = vunpack.c.l.b16 %v18
  %v51 = vunpack.c.l.b16 %v19
  %v52 = vunpack.c.l.b16 %v20
  %v53 = vunpack.c.l.b16 %v21
  %v54 = vunpack.c.l.b16 %v22
  %v55 = vpack.c.b16 %v48, %v47
  %v56 = vpack.c.b16 %v50, %v49
  %v57 = vpack.c.b16 %v52, %v51
  %v58 = vpack.c.b16 %v54, %v53
  %v63 = vunpack.c.l.b16 %v23
  %v64 = vunpack.c.h.b16 %v23
  %v65 = vunpack.c.l.b16 %v24
  %v66 = vunpack.c.h.b16 %v24
  %v67 = vunpack.c.l.b16 %v25
  %v68 = vunpack.c.h.b16 %v25
  %v69 = vunpack.c.l.b16 %v26
  %v70 = vunpack.c.h.b16 %v26
  %v71 = vpack.c.b16 %v65, %v63
  %v72 = vpack.c.b16 %v66, %v64
  %v73 = vpack.c.b16 %v69, %v67
  %v74 = vpack.c.b16 %v70, %v68
  %vm79 = vcmask 261120
  %v81 = vsel %vm79, %v55, 0
  %v84 = vsel %vm79, %v56, 0
  %v87 = vsel %vm79, %v57, 0
  %v90 = vsel %vm79, %v58, 0
  %92 = vmatprep.subr.bf16.mxu0 %v72
  %93 = vmatpush1.bf16.msra.mxu0 %v71
  %94 = vmatprep.subr.bf16.mxu0 %v74
  %95 = vmatpush1.bf16.msra.mxu0 %v73
  %96 = vmatprep.subr.bf16.mxu0 0
  %97 = vmatpush1.bf16.msra.mxu0 0
  %98 = vmatprep.subr.bf16.mxu0 0
  %99 = vmatpush1.bf16.msra.mxu0 0
  %100 = vmatprep.subr.bf16.mxu0 0
  %101 = vmatpush1.bf16.msra.mxu0 0
  %102 = vmatprep.subr.bf16.mxu0 0
  %103 = vmatpush1.bf16.msra.mxu0 0
  %104 = vmatprep.subr.bf16.mxu0 0
  %105 = vmatpush1.bf16.msra.mxu0 0
  %106 = vmatprep.subr.bf16.mxu0 0
  %107 = vmatpush1.bf16.msra.mxu0 0
  %108 = vmatprep.subr.bf16.mxu0 0
  %109 = vmatpush1.bf16.msra.mxu0 0
  %110 = vmatprep.subr.bf16.mxu0 0
  %111 = vmatpush1.bf16.msra.mxu0 0
  %112 = vmatprep.subr.bf16.mxu0 0
  %113 = vmatpush1.bf16.msra.mxu0 0
  %114 = vmatprep.subr.bf16.mxu0 0
  %115 = vmatpush1.bf16.msra.mxu0 0
  %116 = vmatprep.subr.bf16.mxu0 0
  %117 = vmatpush1.bf16.msra.mxu0 0
  %118 = vmatprep.subr.bf16.mxu0 0
  %119 = vmatpush1.bf16.msra.mxu0 0
  %120 = vmatprep.subr.bf16.mxu0 0
  %121 = vmatpush1.bf16.msra.mxu0 0
  %122 = vmatprep.subr.bf16.mxu0 0
  %123 = vmatpush1.bf16.msra.mxu0 0
  %124 = vmatprep.mubr.bf16.mxu0 0
  %125 = vmatmul.mubr.bf16.gmra.mrb[0].mxu0 %v81
  %v126 = vpop.f32.mrb[0].mxu0
  %v127 = vadd.f32 %v32, %v126
  %v128 = vpop.f32.mrb[0].mxu0
  %v129 = vadd.f32 %v36, %v128
  %v130 = vpop.f32.mrb[0].mxu0
  %v131 = vadd.f32 %v32, %v130
  %v132 = vpop.f32.mrb[0].mxu0
  %v133 = vadd.f32 %v36, %v132
  %134 = vmatprep.mubr.bf16.mxu0 0
  %135 = vmatmul.mubr.bf16.gmra.mrb[0].mxu0 %v84
  %v136 = vpop.f32.mrb[0].mxu0
  %v137 = vadd.f32 %v32, %v136
  %v138 = vpop.f32.mrb[0].mxu0
  %v139 = vadd.f32 %v36, %v138
  %v140 = vpop.f32.mrb[0].mxu0
  %v141 = vadd.f32 %v32, %v140
  %v142 = vpop.f32.mrb[0].mxu0
  %v143 = vadd.f32 %v36, %v142
  %144 = vmatprep.mubr.bf16.mxu0 0
  %145 = vmatmul.mubr.bf16.gmra.mrb[0].mxu0 %v87
  %v146 = vpop.f32.mrb[0].mxu0
  %v147 = vadd.f32 %v32, %v146
  %v148 = vpop.f32.mrb[0].mxu0
  %v149 = vadd.f32 %v36, %v148
  %v150 = vpop.f32.mrb[0].mxu0
  %v151 = vadd.f32 %v32, %v150
  %v152 = vpop.f32.mrb[0].mxu0
  %v153 = vadd.f32 %v36, %v152
  %154 = vmatprep.mubr.bf16.mxu0 0
  %155 = vmatmul.mubr.bf16.gmra.mrb[0].mxu0 %v90
  %v156 = vpop.f32.mrb[0].mxu0
  %v157 = vadd.f32 %v32, %v156
  %v158 = vpop.f32.mrb[0].mxu0
  %v159 = vadd.f32 %v36, %v158
  %v160 = vpop.f32.mrb[0].mxu0
  %v161 = vadd.f32 %v32, %v160
  %v162 = vpop.f32.mrb[0].mxu0
  %v163 = vadd.f32 %v36, %v162
  %164 = vdwg.mxu0
  %v165 = vpack.c.bf16 %v131, %v127
  %v166 = vpack.c.bf16 %v133, %v129
  %v167 = vpack.c.bf16 %v141, %v137
  %v168 = vpack.c.bf16 %v143, %v139
  %v169 = vpack.c.bf16 %v151, %v147
  %v170 = vpack.c.bf16 %v153, %v149
  %v171 = vpack.c.bf16 %v161, %v157
  %v172 = vpack.c.bf16 %v163, %v159
  %v181 = vunpack.c.l.b16 %v165
  %v182 = vunpack.c.l.b16 %v166
  %v183 = vunpack.c.h.b16 %v165
  %v184 = vunpack.c.h.b16 %v166
  %v185 = vunpack.c.l.b16 %v167
  %v186 = vunpack.c.l.b16 %v168
  %v187 = vunpack.c.h.b16 %v167
  %v188 = vunpack.c.h.b16 %v168
  %v189 = vunpack.c.l.b16 %v169
  %v190 = vunpack.c.l.b16 %v170
  %v191 = vunpack.c.h.b16 %v169
  %v192 = vunpack.c.h.b16 %v170
  %v193 = vunpack.c.l.b16 %v171
  %v194 = vunpack.c.l.b16 %v172
  %v195 = vunpack.c.h.b16 %v171
  %v196 = vunpack.c.h.b16 %v172
  %v197 = vpack.c.b16 %v182, %v181
  %v198 = vpack.c.b16 %v184, %v183
  %v199 = vpack.c.b16 %v186, %v185
  %v200 = vpack.c.b16 %v188, %v187
  %v201 = vpack.c.b16 %v190, %v189
  %v202 = vpack.c.b16 %v192, %v191
  %v203 = vpack.c.b16 %v194, %v193
  %v204 = vpack.c.b16 %v196, %v195
  %213 = vst [vmem:[%s3] sm:$0xff] %v197
  %214 = vst [vmem:[%s3 + $0x8] sm:$0xff] %v198
  %215 = vst [vmem:[%s3 + $0x10] sm:$0xff] %v199
  %216 = vst [vmem:[%s3 + $0x18] sm:$0xff] %v200
  %217 = vst [vmem:[%s3 + $0x20] sm:$0xff] %v201
  %218 = vst [vmem:[%s3 + $0x28] sm:$0xff] %v202
  %219 = vst [vmem:[%s3 + $0x30] sm:$0xff] %v203
  %220 = vst [vmem:[%s3 + $0x38] sm:$0xff] %v204
  // Predicated region
  $region14: #{blstm_forward.5} parent=0 // pred_check
    _
  $region15: #{blstm_forward.5} parent=0 // pred_check_branch
    %222 = sbr.rel (0) target = $region17
  $region16: #{blstm_forward.5} parent=0 // pred_region
    _
  $region17: #{blstm_forward.5} parent=0 // pred_fallthru
    _
  // Predicated region
  $region18: #{blstm_forward.5} parent=0 // pred_check
    _
  $region19: #{blstm_forward.5} parent=0 // pred_check_branch
    %224 = sbr.rel (0) target = $region21
  $region20: #{blstm_forward.5} parent=0 // pred_region
    _
  $region21: #{blstm_forward.5} parent=0 // pred_fallthru
    _

// kernel: blstm_forward.7
$region0: #{blstm_forward.7}
  #allocation0 [shape = 'u32[]', space=smem, size = 0x4, offset = 0x4, fixed_abs, tag = 'smem constant byte address 0x4 - core index']
  #allocation1 [shape = 'u32[144,128]{1,0:T(1,128)}', space=vmem, size = 0x12000, scoped, tag = 'internal scratch']
  %s0 = inlined_call_operand.vmem [shape: bf16[64,32], index: 0, kind: input, shape index: {}]
  %s1 = inlined_call_operand.vmem [shape: bf16[64,32], index: 1, kind: input, shape index: {}]
  %s2 = inlined_call_operand.vmem [shape: bf16[32,256], index: 2, kind: input, shape index: {}]
  %s3 = inlined_call_operand.vmem [shape: bf16[32,256], index: 3, kind: input, shape index: {}]
  %s4 = inlined_call_operand.vmem [shape: f32[1,256], index: 4, kind: input, shape index: {}]
  %s5 = inlined_call_operand.vmem [shape: bf16[64,256], index: 5, kind: output, shape index: {}]
  %s6 = sld [smem:[#allocation0]]
  $region30: #{blstm_forward.7} parent=0
    _
  %s8 = ssub.s32 1, %s6
  %s9 = scalar_select 0, %s8, %s6
  // Predicated region
  $region2: #{blstm_forward.7} parent=0 // pred_check
    _
  $region3: #{blstm_forward.7} parent=0 // pred_check_branch
    %11 = sbr.rel (0) target = $region5
  $region4: #{blstm_forward.7} parent=0 // pred_region
    _
  $region5: #{blstm_forward.7} parent=0 // pred_fallthru
    _
  // Predicated region
  $region6: #{blstm_forward.7} parent=0 // pred_check
    _
  $region7: #{blstm_forward.7} parent=0 // pred_check_branch
    %13 = sbr.rel (0) target = $region9
  $region8: #{blstm_forward.7} parent=0 // pred_region
    _
  $region9: #{blstm_forward.7} parent=0 // pred_fallthru
    _
  // Predicated region
  $region10: #{blstm_forward.7} parent=0 // pred_check
    _
  $region11: #{blstm_forward.7} parent=0 // pred_check_branch
    %15 = sbr.rel (0) target = $region13
  $region12: #{blstm_forward.7} parent=0 // pred_region
    _
  $region13: #{blstm_forward.7} parent=0 // pred_fallthru
    _
  // Predicated region
  $region14: #{blstm_forward.7} parent=0 // pred_check
    _
  $region15: #{blstm_forward.7} parent=0 // pred_check_branch
    %17 = sbr.rel (0) target = $region17
  $region16: #{blstm_forward.7} parent=0 // pred_region
    _
  $region17: #{blstm_forward.7} parent=0 // pred_fallthru
    _
  // Predicated region
  $region18: #{blstm_forward.7} parent=0 // pred_check
    _
  $region19: #{blstm_forward.7} parent=0 // pred_check_branch
    %19 = sbr.rel (0) target = $region21
  $region20: #{blstm_forward.7} parent=0 // pred_region
    _
  $region21: #{blstm_forward.7} parent=0 // pred_fallthru
    _
  %v21 = vld [vmem:[%s0] sm:$0xf]
  %v22 = vld [vmem:[%s0 + $0x4] sm:$0xf]
  %v23 = vld [vmem:[%s0 + $0x8] sm:$0xf]
  %v24 = vld [vmem:[%s0 + $0xc] sm:$0xf]
  %v25 = vld [vmem:[%s0 + $0x10] sm:$0xf]
  %v26 = vld [vmem:[%s0 + $0x14] sm:$0xf]
  %v27 = vld [vmem:[%s0 + $0x18] sm:$0xf]
  %v28 = vld [vmem:[%s0 + $0x1c] sm:$0xf]
  %v29 = vld [vmem:[%s2] sm:$0xff]
  %v30 = vld [vmem:[%s2 + $0x8] sm:$0xff]
  %v31 = vld [vmem:[%s2 + $0x10] sm:$0xff]
  %v32 = vld [vmem:[%s2 + $0x18] sm:$0xff]
  %v33 = vld [vmem:[%s1] sm:$0xf]
  %v34 = vld [vmem:[%s1 + $0x4] sm:$0xf]
  %v35 = vld [vmem:[%s1 + $0x8] sm:$0xf]
  %v36 = vld [vmem:[%s1 + $0xc] sm:$0xf]
  %v37 = vld [vmem:[%s1 + $0x10] sm:$0xf]
  %v38 = vld [vmem:[%s1 + $0x14] sm:$0xf]
  %v39 = vld [vmem:[%s1 + $0x18] sm:$0xf]
  %v40 = vld [vmem:[%s1 + $0x1c] sm:$0xf]
  %v41 = vld [vmem:[%s3] sm:$0xff]
  %v42 = vld [vmem:[%s3 + $0x8] sm:$0xff]
  %v43 = vld [vmem:[%s3 + $0x10] sm:$0xff]
  %v44 = vld [vmem:[%s3 + $0x18] sm:$0xff]
  %v53 = vunpack.c.l.b16 %v33
  %v54 = vunpack.c.l.b16 %v34
  %v55 = vunpack.c.l.b16 %v35
  %v56 = vunpack.c.l.b16 %v36
  %v57 = vunpack.c.l.b16 %v37
  %v58 = vunpack.c.l.b16 %v38
  %v59 = vunpack.c.l.b16 %v39
  %v60 = vunpack.c.l.b16 %v40
  %v61 = vpack.c.b16 %v54, %v53
  %v62 = vpack.c.b16 %v56, %v55
  %v63 = vpack.c.b16 %v58, %v57
  %v64 = vpack.c.b16 %v60, %v59
  %v69 = vunpack.c.l.b16 %v41
  %v70 = vunpack.c.h.b16 %v41
  %v71 = vunpack.c.l.b16 %v42
  %v72 = vunpack.c.h.b16 %v42
  %v73 = vunpack.c.l.b16 %v43
  %v74 = vunpack.c.h.b16 %v43
  %v75 = vunpack.c.l.b16 %v44
  %v76 = vunpack.c.h.b16 %v44
  %v77 = vpack.c.b16 %v71, %v69
  %v78 = vpack.c.b16 %v72, %v70
  %v79 = vpack.c.b16 %v75, %v73
  %v80 = vpack.c.b16 %v76, %v74
  %vm85 = vcmask 261120
  %v87 = vsel %vm85, %v61, 0
  %v90 = vsel %vm85, %v62, 0
  %v93 = vsel %vm85, %v63, 0
  %v96 = vsel %vm85, %v64, 0
  %98 = vmatprep.subr.bf16.mxu0 %v78
  %99 = vmatpush1.bf16.msra.mxu0 %v77
  %100 = vmatprep.subr.bf16.mxu0 %v80
  %101 = vmatpush1.bf16.msra.mxu0 %v79
  %102 = vmatprep.subr.bf16.mxu0 0
  %103 = vmatpush1.bf16.msra.mxu0 0
  %104 = vmatprep.subr.bf16.mxu0 0
  %105 = vmatpush1.bf16.msra.mxu0 0
  %106 = vmatprep.subr.bf16.mxu0 0
  %107 = vmatpush1.bf16.msra.mxu0 0
  %108 = vmatprep.subr.bf16.mxu0 0
  %109 = vmatpush1.bf16.msra.mxu0 0
  %110 = vmatprep.subr.bf16.mxu0 0
  %111 = vmatpush1.bf16.msra.mxu0 0
  %112 = vmatprep.subr.bf16.mxu0 0
  %113 = vmatpush1.bf16.msra.mxu0 0
  %114 = vmatprep.subr.bf16.mxu0 0
  %115 = vmatpush1.bf16.msra.mxu0 0
  %116 = vmatprep.subr.bf16.mxu0 0
  %117 = vmatpush1.bf16.msra.mxu0 0
  %118 = vmatprep.subr.bf16.mxu0 0
  %119 = vmatpush1.bf16.msra.mxu0 0
  %120 = vmatprep.subr.bf16.mxu0 0
  %121 = vmatpush1.bf16.msra.mxu0 0
  %122 = vmatprep.subr.bf16.mxu0 0
  %123 = vmatpush1.bf16.msra.mxu0 0
  %124 = vmatprep.subr.bf16.mxu0 0
  %125 = vmatpush1.bf16.msra.mxu0 0
  %126 = vmatprep.subr.bf16.mxu0 0
  %127 = vmatpush1.bf16.msra.mxu0 0
  %128 = vmatprep.subr.bf16.mxu0 0
  %129 = vmatpush1.bf16.msra.mxu0 0
  %130 = vmatprep.mubr.bf16.mxu0 0
  %131 = vmatmul.mubr.bf16.gmra.mrb[0].mxu0 %v87
  %v132 = vpop.f32.mrb[0].mxu0
  %v133 = vadd.f32 0.0, %v132
  %v134 = vpop.f32.mrb[0].mxu0
  %v135 = vadd.f32 0.0, %v134
  %v136 = vpop.f32.mrb[0].mxu0
  %v137 = vadd.f32 0.0, %v136
  %v138 = vpop.f32.mrb[0].mxu0
  %v139 = vadd.f32 0.0, %v138
  %140 = vmatprep.mubr.bf16.mxu0 0
  %141 = vmatmul.mubr.bf16.gmra.mrb[0].mxu0 %v90
  %v142 = vpop.f32.mrb[0].mxu0
  %v143 = vadd.f32 0.0, %v142
  %v144 = vpop.f32.mrb[0].mxu0
  %v145 = vadd.f32 0.0, %v144
  %v146 = vpop.f32.mrb[0].mxu0
  %v147 = vadd.f32 0.0, %v146
  %v148 = vpop.f32.mrb[0].mxu0
  %v149 = vadd.f32 0.0, %v148
  %150 = vmatprep.mubr.bf16.mxu0 0
  %151 = vmatmul.mubr.bf16.gmra.mrb[0].mxu0 %v93
  %v152 = vpop.f32.mrb[0].mxu0
  %v153 = vadd.f32 0.0, %v152
  %v154 = vpop.f32.mrb[0].mxu0
  %v155 = vadd.f32 0.0, %v154
  %v156 = vpop.f32.mrb[0].mxu0
  %v157 = vadd.f32 0.0, %v156
  %v158 = vpop.f32.mrb[0].mxu0
  %v159 = vadd.f32 0.0, %v158
  %160 = vmatprep.mubr.bf16.mxu0 0
  %161 = vmatmul.mubr.bf16.gmra.mrb[0].mxu0 %v96
  %v162 = vpop.f32.mrb[0].mxu0
  %v163 = vadd.f32 0.0, %v162
  %v164 = vpop.f32.mrb[0].mxu0
  %v165 = vadd.f32 0.0, %v164
  %v166 = vpop.f32.mrb[0].mxu0
  %v167 = vadd.f32 0.0, %v166
  %v168 = vpop.f32.mrb[0].mxu0
  %v169 = vadd.f32 0.0, %v168
  %170 = vdwg.mxu0
  %v179 = vunpack.c.l.b16 %v21
  %v180 = vunpack.c.l.b16 %v22
  %v181 = vunpack.c.l.b16 %v23
  %v182 = vunpack.c.l.b16 %v24
  %v183 = vunpack.c.l.b16 %v25
  %v184 = vunpack.c.l.b16 %v26
  %v185 = vunpack.c.l.b16 %v27
  %v186 = vunpack.c.l.b16 %v28
  %v187 = vpack.c.b16 %v180, %v179
  %v188 = vpack.c.b16 %v182, %v181
  %v189 = vpack.c.b16 %v184, %v183
  %v190 = vpack.c.b16 %v186, %v185
  %v195 = vunpack.c.l.b16 %v29
  %v196 = vunpack.c.h.b16 %v29
  %v197 = vunpack.c.l.b16 %v30
  %v198 = vunpack.c.h.b16 %v30
  %v199 = vunpack.c.l.b16 %v31
  %v200 = vunpack.c.h.b16 %v31
  %v201 = vunpack.c.l.b16 %v32
  %v202 = vunpack.c.h.b16 %v32
  %v203 = vpack.c.b16 %v197, %v195
  %v204 = vpack.c.b16 %v198, %v196
  %v205 = vpack.c.b16 %v201, %v199
  %v206 = vpack.c.b16 %v202, %v200
  %v212 = vsel %vm85, %v187, 0
  %v215 = vsel %vm85, %v188, 0
  %v218 = vsel %vm85, %v189, 0
  %v221 = vsel %vm85, %v190, 0
  %223 = vmatprep.subr.bf16.mxu0 %v204
  %224 = vmatpush1.bf16.msra.mxu0 %v203
  %225 = vmatprep.subr.bf16.mxu0 %v206
  %226 = vmatpush1.bf16.msra.mxu0 %v205
  %227 = vmatprep.subr.bf16.mxu0 0
  %228 = vmatpush1.bf16.msra.mxu0 0
  %229 = vmatprep.subr.bf16.mxu0 0
  %230 = vmatpush1.bf16.msra.mxu0 0
  %231 = vmatprep.subr.bf16.mxu0 0
  %232 = vmatpush1.bf16.msra.mxu0 0
  %233 = vmatprep.subr.bf16.mxu0 0
  %234 = vmatpush1.bf16.msra.mxu0 0
  %235 = vmatprep.subr.bf16.mxu0 0
  %236 = vmatpush1.bf16.msra.mxu0 0
  %237 = vmatprep.subr.bf16.mxu0 0
  %238 = vmatpush1.bf16.msra.mxu0 0
  %239 = vmatprep.subr.bf16.mxu0 0
  %240 = vmatpush1.bf16.msra.mxu0 0
  %241 = vmatprep.subr.bf16.mxu0 0
  %242 = vmatpush1.bf16.msra.mxu0 0
  %243 = vmatprep.subr.bf16.mxu0 0
  %244 = vmatpush1.bf16.msra.mxu0 0
  %245 = vmatprep.subr.bf16.mxu0 0
  %246 = vmatpush1.bf16.msra.mxu0 0
  %247 = vmatprep.subr.bf16.mxu0 0
  %248 = vmatpush1.bf16.msra.mxu0 0
  %249 = vmatprep.subr.bf16.mxu0 0
  %250 = vmatpush1.bf16.msra.mxu0 0
  %251 = vmatprep.subr.bf16.mxu0 0
  %252 = vmatpush1.bf16.msra.mxu0 0
  %253 = vmatprep.subr.bf16.mxu0 0
  %254 = vmatpush1.bf16.msra.mxu0 0
  %255 = vmatprep.mubr.bf16.mxu0 0
  %256 = vmatmul.mubr.bf16.gmra.mrb[0].mxu0 %v212
  %v257 = vpop.f32.mrb[0].mxu0
  %v258 = vadd.f32 %v133, %v257
  %v259 = vpop.f32.mrb[0].mxu0
  %v260 = vadd.f32 %v135, %v259
  %v261 = vpop.f32.mrb[0].mxu0
  %v262 = vadd.f32 %v137, %v261
  %v263 = vpop.f32.mrb[0].mxu0
  %v264 = vadd.f32 %v139, %v263
  %265 = vmatprep.mubr.bf16.mxu0 0
  %266 = vmatmul.mubr.bf16.gmra.mrb[0].mxu0 %v215
  %v267 = vpop.f32.mrb[0].mxu0
  %v268 = vadd.f32 %v143, %v267
  %v269 = vpop.f32.mrb[0].mxu0
  %v270 = vadd.f32 %v145, %v269
  %v271 = vpop.f32.mrb[0].mxu0
  %v272 = vadd.f32 %v147, %v271
  %v273 = vpop.f32.mrb[0].mxu0
  %v274 = vadd.f32 %v149, %v273
  %275 = vmatprep.mubr.bf16.mxu0 0
  %276 = vmatmul.mubr.bf16.gmra.mrb[0].mxu0 %v218
  %v277 = vpop.f32.mrb[0].mxu0
  %v278 = vadd.f32 %v153, %v277
  %v279 = vpop.f32.mrb[0].mxu0
  %v280 = vadd.f32 %v155, %v279
  %v281 = vpop.f32.mrb[0].mxu0
  %v282 = vadd.f32 %v157, %v281
  %v283 = vpop.f32.mrb[0].mxu0
  %v284 = vadd.f32 %v159, %v283
  %285 = vmatprep.mubr.bf16.mxu0 0
  %286 = vmatmul.mubr.bf16.gmra.mrb[0].mxu0 %v221
  %v287 = vpop.f32.mrb[0].mxu0
  %v288 = vadd.f32 %v163, %v287
  %v289 = vpop.f32.mrb[0].mxu0
  %v290 = vadd.f32 %v165, %v289
  %v291 = vpop.f32.mrb[0].mxu0
  %v292 = vadd.f32 %v167, %v291
  %v293 = vpop.f32.mrb[0].mxu0
  %v294 = vadd.f32 %v169, %v293
  %295 = vdwg.mxu0
  %v296 = vld [vmem:[%s4] sm:$0x3]
  %v298 = vlaneseq
  %v299 = vshrl.u32 %v298, 7
  %v300 = vsub.s32 0, %v299
  %v301 = vrot.slane %v296, %v300
  %v302 = vlaneseq
  %v303 = vshrl.u32 %v302, 7
  %v304 = vsub.s32 1, %v303
  %v305 = vrot.slane %v296, %v304
  %v308 = vadd.f32 %v258, %v301
  %v309 = vadd.f32 %v260, %v305
  %v310 = vadd.f32 %v262, %v301
  %v311 = vadd.f32 %v264, %v305
  %v312 = vadd.f32 %v268, %v301
  %v313 = vadd.f32 %v270, %v305
  %v314 = vadd.f32 %v272, %v301
  %v315 = vadd.f32 %v274, %v305
  %v316 = vadd.f32 %v278, %v301
  %v317 = vadd.f32 %v280, %v305
  %v318 = vadd.f32 %v282, %v301
  %v319 = vadd.f32 %v284, %v305
  %v320 = vadd.f32 %v288, %v301
  %v321 = vadd.f32 %v290, %v305
  %v322 = vadd.f32 %v292, %v301
  %v323 = vadd.f32 %v294, %v305
  %v324 = vpack.c.bf16 %v310, %v308
  %v325 = vpack.c.bf16 %v311, %v309
  %v326 = vpack.c.bf16 %v314, %v312
  %v327 = vpack.c.bf16 %v315, %v313
  %v328 = vpack.c.bf16 %v318, %v316
  %v329 = vpack.c.bf16 %v319, %v317
  %v330 = vpack.c.bf16 %v322, %v320
  %v331 = vpack.c.bf16 %v323, %v321
  %v340 = vunpack.c.l.b16 %v324
  %v341 = vunpack.c.l.b16 %v325
  %v342 = vunpack.c.h.b16 %v324
  %v343 = vunpack.c.h.b16 %v325
  %v344 = vunpack.c.l.b16 %v326
  %v345 = vunpack.c.l.b16 %v327
  %v346 = vunpack.c.h.b16 %v326
  %v347 = vunpack.c.h.b16 %v327
  %v348 = vunpack.c.l.b16 %v328
  %v349 = vunpack.c.l.b16 %v329
  %v350 = vunpack.c.h.b16 %v328
  %v351 = vunpack.c.h.b16 %v329
  %v352 = vunpack.c.l.b16 %v330
  %v353 = vunpack.c.l.b16 %v331
  %v354 = vunpack.c.h.b16 %v330
  %v355 = vunpack.c.h.b16 %v331
  %v356 = vpack.c.b16 %v341, %v340
  %v357 = vpack.c.b16 %v343, %v342
  %v358 = vpack.c.b16 %v345, %v344
  %v359 = vpack.c.b16 %v347, %v346
  %v360 = vpack.c.b16 %v349, %v348
  %v361 = vpack.c.b16 %v351, %v350
  %v362 = vpack.c.b16 %v353, %v352
  %v363 = vpack.c.b16 %v355, %v354
  %372 = vst [vmem:[%s5] sm:$0xff] %v356
  %373 = vst [vmem:[%s5 + $0x8] sm:$0xff] %v357
  %374 = vst [vmem:[%s5 + $0x10] sm:$0xff] %v358
  %375 = vst [vmem:[%s5 + $0x18] sm:$0xff] %v359
  %376 = vst [vmem:[%s5 + $0x20] sm:$0xff] %v360
  %377 = vst [vmem:[%s5 + $0x28] sm:$0xff] %v361
  %378 = vst [vmem:[%s5 + $0x30] sm:$0xff] %v362
  %379 = vst [vmem:[%s5 + $0x38] sm:$0xff] %v363
  // Predicated region
  $region22: #{blstm_forward.7} parent=0 // pred_check
    _
  $region23: #{blstm_forward.7} parent=0 // pred_check_branch
    %381 = sbr.rel (0) target = $region25
  $region24: #{blstm_forward.7} parent=0 // pred_region
    _
  $region25: #{blstm_forward.7} parent=0 // pred_fallthru
    _
  // Predicated region
  $region26: #{blstm_forward.7} parent=0 // pred_check
    _
  $region27: #{blstm_forward.7} parent=0 // pred_check_branch
    %383 = sbr.rel (0) target = $region29
  $region28: #{blstm_forward.7} parent=0 // pred_region
    _
  $region29: #{blstm_forward.7} parent=0 // pred_fallthru
    _

// kernel: blstm_forward.9
$region0: #{blstm_forward.9}
  #allocation0 [shape = 'u32[]', space=smem, size = 0x4, offset = 0x4, fixed_abs, tag = 'smem constant byte address 0x4 - core index']
  #allocation1 [shape = 'u32[144,128]{1,0:T(1,128)}', space=vmem, size = 0x12000, scoped, tag = 'internal scratch']
  %s0 = inlined_call_operand.vmem [shape: bf16[64,32], index: 0, kind: input, shape index: {}]
  %s1 = inlined_call_operand.vmem [shape: bf16[64,32], index: 1, kind: input, shape index: {}]
  %s2 = inlined_call_operand.vmem [shape: bf16[32,32], index: 2, kind: input, shape index: {}]
  %s3 = inlined_call_operand.vmem [shape: bf16[32,32], index: 3, kind: input, shape index: {}]
  %s4 = inlined_call_operand.vmem [shape: f32[1,32], index: 4, kind: input, shape index: {}]
  %s5 = inlined_call_operand.vmem [shape: f32[64,32], index: 5, kind: output, shape index: {}]
  %s6 = sld [smem:[#allocation0]]
  $region30: #{blstm_forward.9} parent=0
    _
  %s8 = ssub.s32 1, %s6
  %s9 = scalar_select 0, %s8, %s6
  // Predicated region
  $region2: #{blstm_forward.9} parent=0 // pred_check
    _
  $region3: #{blstm_forward.9} parent=0 // pred_check_branch
    %11 = sbr.rel (0) target = $region5
  $region4: #{blstm_forward.9} parent=0 // pred_region
    _
  $region5: #{blstm_forward.9} parent=0 // pred_fallthru
    _
  // Predicated region
  $region6: #{blstm_forward.9} parent=0 // pred_check
    _
  $region7: #{blstm_forward.9} parent=0 // pred_check_branch
    %13 = sbr.rel (0) target = $region9
  $region8: #{blstm_forward.9} parent=0 // pred_region
    _
  $region9: #{blstm_forward.9} parent=0 // pred_fallthru
    _
  // Predicated region
  $region10: #{blstm_forward.9} parent=0 // pred_check
    _
  $region11: #{blstm_forward.9} parent=0 // pred_check_branch
    %15 = sbr.rel (0) target = $region13
  $region12: #{blstm_forward.9} parent=0 // pred_region
    _
  $region13: #{blstm_forward.9} parent=0 // pred_fallthru
    _
  // Predicated region
  $region14: #{blstm_forward.9} parent=0 // pred_check
    _
  $region15: #{blstm_forward.9} parent=0 // pred_check_branch
    %17 = sbr.rel (0) target = $region17
  $region16: #{blstm_forward.9} parent=0 // pred_region
    _
  $region17: #{blstm_forward.9} parent=0 // pred_fallthru
    _
  // Predicated region
  $region18: #{blstm_forward.9} parent=0 // pred_check
    _
  $region19: #{blstm_forward.9} parent=0 // pred_check_branch
    %19 = sbr.rel (0) target = $region21
  $region20: #{blstm_forward.9} parent=0 // pred_region
    _
  $region21: #{blstm_forward.9} parent=0 // pred_fallthru
    _
  %v21 = vld [vmem:[%s0] sm:$0xf]
  %v22 = vld [vmem:[%s0 + $0x4] sm:$0xf]
  %v23 = vld [vmem:[%s0 + $0x8] sm:$0xf]
  %v24 = vld [vmem:[%s0 + $0xc] sm:$0xf]
  %v25 = vld [vmem:[%s0 + $0x10] sm:$0xf]
  %v26 = vld [vmem:[%s0 + $0x14] sm:$0xf]
  %v27 = vld [vmem:[%s0 + $0x18] sm:$0xf]
  %v28 = vld [vmem:[%s0 + $0x1c] sm:$0xf]
  %v29 = vld [vmem:[%s2] sm:$0xf]
  %v30 = vld [vmem:[%s2 + $0x4] sm:$0xf]
  %v31 = vld [vmem:[%s2 + $0x8] sm:$0xf]
  %v32 = vld [vmem:[%s2 + $0xc] sm:$0xf]
  %v33 = vld [vmem:[%s1] sm:$0xf]
  %v34 = vld [vmem:[%s1 + $0x4] sm:$0xf]
  %v35 = vld [vmem:[%s1 + $0x8] sm:$0xf]
  %v36 = vld [vmem:[%s1 + $0xc] sm:$0xf]
  %v37 = vld [vmem:[%s1 + $0x10] sm:$0xf]
  %v38 = vld [vmem:[%s1 + $0x14] sm:$0xf]
  %v39 = vld [vmem:[%s1 + $0x18] sm:$0xf]
  %v40 = vld [vmem:[%s1 + $0x1c] sm:$0xf]
  %v41 = vld [vmem:[%s3] sm:$0xf]
  %v42 = vld [vmem:[%s3 + $0x4] sm:$0xf]
  %v43 = vld [vmem:[%s3 + $0x8] sm:$0xf]
  %v44 = vld [vmem:[%s3 + $0xc] sm:$0xf]
  %v53 = vunpack.c.l.b16 %v33
  %v54 = vunpack.c.l.b16 %v34
  %v55 = vunpack.c.l.b16 %v35
  %v56 = vunpack.c.l.b16 %v36
  %v57 = vunpack.c.l.b16 %v37
  %v58 = vunpack.c.l.b16 %v38
  %v59 = vunpack.c.l.b16 %v39
  %v60 = vunpack.c.l.b16 %v40
  %v61 = vpack.c.b16 %v54, %v53
  %v62 = vpack.c.b16 %v56, %v55
  %v63 = vpack.c.b16 %v58, %v57
  %v64 = vpack.c.b16 %v60, %v59
  %v69 = vunpack.c.l.b16 %v41
  %v70 = vunpack.c.l.b16 %v42
  %v71 = vunpack.c.l.b16 %v43
  %v72 = vunpack.c.l.b16 %v44
  %v73 = vpack.c.b16 %v70, %v69
  %v74 = vpack.c.b16 %v72, %v71
  %vm77 = vcmask 261120
  %v79 = vsel %vm77, %v61, 0
  %v82 = vsel %vm77, %v62, 0
  %v85 = vsel %vm77, %v63, 0
  %v88 = vsel %vm77, %v64, 0
  %90 = vmatprep.subr.bf16.mxu0 0
  %91 = vmatpush1.bf16.msra.mxu0 %v73
  %92 = vmatprep.subr.bf16.mxu0 0
  %93 = vmatpush1.bf16.msra.mxu0 %v74
  %94 = vmatprep.subr.bf16.mxu0 0
  %95 = vmatpush1.bf16.msra.mxu0 0
  %96 = vmatprep.subr.bf16.mxu0 0
  %97 = vmatpush1.bf16.msra.mxu0 0
  %98 = vmatprep.subr.bf16.mxu0 0
  %99 = vmatpush1.bf16.msra.mxu0 0
  %100 = vmatprep.subr.bf16.mxu0 0
  %101 = vmatpush1.bf16.msra.mxu0 0
  %102 = vmatprep.subr.bf16.mxu0 0
  %103 = vmatpush1.bf16.msra.mxu0 0
  %104 = vmatprep.subr.bf16.mxu0 0
  %105 = vmatpush1.bf16.msra.mxu0 0
  %106 = vmatprep.subr.bf16.mxu0 0
  %107 = vmatpush1.bf16.msra.mxu0 0
  %108 = vmatprep.subr.bf16.mxu0 0
  %109 = vmatpush1.bf16.msra.mxu0 0
  %110 = vmatprep.subr.bf16.mxu0 0
  %111 = vmatpush1.bf16.msra.mxu0 0
  %112 = vmatprep.subr.bf16.mxu0 0
  %113 = vmatpush1.bf16.msra.mxu0 0
  %114 = vmatprep.subr.bf16.mxu0 0
  %115 = vmatpush1.bf16.msra.mxu0 0
  %116 = vmatprep.subr.bf16.mxu0 0
  %117 = vmatpush1.bf16.msra.mxu0 0
  %118 = vmatprep.subr.bf16.mxu0 0
  %119 = vmatpush1.bf16.msra.mxu0 0
  %120 = vmatprep.subr.bf16.mxu0 0
  %121 = vmatpush1.bf16.msra.mxu0 0
  %122 = vmatprep.mubr.bf16.mxu0 0
  %123 = vmatmul.mubr.bf16.gmra.mrb[0].mxu0 %v79
  %v124 = vpop.f32.mrb[0].mxu0
  %v125 = vadd.f32 0.0, %v124
  %v126 = vpop.f32.mrb[0].mxu0
  %v127 = vpop.f32.mrb[0].mxu0
  %v128 = vadd.f32 0.0, %v127
  %v129 = vpop.f32.mrb[0].mxu0
  %130 = vmatprep.mubr.bf16.mxu0 0
  %131 = vmatmul.mubr.bf16.gmra.mrb[0].mxu0 %v82
  %v132 = vpop.f32.mrb[0].mxu0
  %v133 = vadd.f32 0.0, %v132
  %v134 = vpop.f32.mrb[0].mxu0
  %v135 = vpop.f32.mrb[0].mxu0
  %v136 = vadd.f32 0.0, %v135
  %v137 = vpop.f32.mrb[0].mxu0
  %138 = vmatprep.mubr.bf16.mxu0 0
  %139 = vmatmul.mubr.bf16.gmra.mrb[0].mxu0 %v85
  %v140 = vpop.f32.mrb[0].mxu0
  %v141 = vadd.f32 0.0, %v140
  %v142 = vpop.f32.mrb[0].mxu0
  %v143 = vpop.f32.mrb[0].mxu0
  %v144 = vadd.f32 0.0, %v143
  %v145 = vpop.f32.mrb[0].mxu0
  %146 = vmatprep.mubr.bf16.mxu0 0
  %147 = vmatmul.mubr.bf16.gmra.mrb[0].mxu0 %v88
  %v148 = vpop.f32.mrb[0].mxu0
  %v149 = vadd.f32 0.0, %v148
  %v150 = vpop.f32.mrb[0].mxu0
  %v151 = vpop.f32.mrb[0].mxu0
  %v152 = vadd.f32 0.0, %v151
  %v153 = vpop.f32.mrb[0].mxu0
  %154 = vdwg.mxu0
  %v163 = vunpack.c.l.b16 %v21
  %v164 = vunpack.c.l.b16 %v22
  %v165 = vunpack.c.l.b16 %v23
  %v166 = vunpack.c.l.b16 %v24
  %v167 = vunpack.c.l.b16 %v25
  %v168 = vunpack.c.l.b16 %v26
  %v169 = vunpack.c.l.b16 %v27
  %v170 = vunpack.c.l.b16 %v28
  %v171 = vpack.c.b16 %v164, %v163
  %v172 = vpack.c.b16 %v166, %v165
  %v173 = vpack.c.b16 %v168, %v167
  %v174 = vpack.c.b16 %v170, %v169
  %v179 = vunpack.c.l.b16 %v29
  %v180 = vunpack.c.l.b16 %v30
  %v181 = vunpack.c.l.b16 %v31
  %v182 = vunpack.c.l.b16 %v32
  %v183 = vpack.c.b16 %v180, %v179
  %v184 = vpack.c.b16 %v182, %v181
  %v188 = vsel %vm77, %v171, 0
  %v191 = vsel %vm77, %v172, 0
  %v194 = vsel %vm77, %v173, 0
  %v197 = vsel %vm77, %v174, 0
  %199 = vmatprep.subr.bf16.mxu0 0
  %200 = vmatpush1.bf16.msra.mxu0 %v183
  %201 = vmatprep.subr.bf16.mxu0 0
  %202 = vmatpush1.bf16.msra.mxu0 %v184
  %203 = vmatprep.subr.bf16.mxu0 0
  %204 = vmatpush1.bf16.msra.mxu0 0
  %205 = vmatprep.subr.bf16.mxu0 0
  %206 = vmatpush1.bf16.msra.mxu0 0
  %207 = vmatprep.subr.bf16.mxu0 0
  %208 = vmatpush1.bf16.msra.mxu0 0
  %209 = vmatprep.subr.bf16.mxu0 0
  %210 = vmatpush1.bf16.msra.mxu0 0
  %211 = vmatprep.subr.bf16.mxu0 0
  %212 = vmatpush1.bf16.msra.mxu0 0
  %213 = vmatprep.subr.bf16.mxu0 0
  %214 = vmatpush1.bf16.msra.mxu0 0
  %215 = vmatprep.subr.bf16.mxu0 0
  %216 = vmatpush1.bf16.msra.mxu0 0
  %217 = vmatprep.subr.bf16.mxu0 0
  %218 = vmatpush1.bf16.msra.mxu0 0
  %219 = vmatprep.subr.bf16.mxu0 0
  %220 = vmatpush1.bf16.msra.mxu0 0
  %221 = vmatprep.subr.bf16.mxu0 0
  %222 = vmatpush1.bf16.msra.mxu0 0
  %223 = vmatprep.subr.bf16.mxu0 0
  %224 = vmatpush1.bf16.msra.mxu0 0
  %225 = vmatprep.subr.bf16.mxu0 0
  %226 = vmatpush1.bf16.msra.mxu0 0
  %227 = vmatprep.subr.bf16.mxu0 0
  %228 = vmatpush1.bf16.msra.mxu0 0
  %229 = vmatprep.subr.bf16.mxu0 0
  %230 = vmatpush1.bf16.msra.mxu0 0
  %231 = vmatprep.mubr.bf16.mxu0 0
  %232 = vmatmul.mubr.bf16.gmra.mrb[0].mxu0 %v188
  %v233 = vpop.f32.mrb[0].mxu0
  %v234 = vadd.f32 %v125, %v233
  %v235 = vpop.f32.mrb[0].mxu0
  %v236 = vpop.f32.mrb[0].mxu0
  %v237 = vadd.f32 %v128, %v236
  %v238 = vpop.f32.mrb[0].mxu0
  %239 = vmatprep.mubr.bf16.mxu0 0
  %240 = vmatmul.mubr.bf16.gmra.mrb[0].mxu0 %v191
  %v241 = vpop.f32.mrb[0].mxu0
  %v242 = vadd.f32 %v133, %v241
  %v243 = vpop.f32.mrb[0].mxu0
  %v244 = vpop.f32.mrb[0].mxu0
  %v245 = vadd.f32 %v136, %v244
  %v246 = vpop.f32.mrb[0].mxu0
  %247 = vmatprep.mubr.bf16.mxu0 0
  %248 = vmatmul.mubr.bf16.gmra.mrb[0].mxu0 %v194
  %v249 = vpop.f32.mrb[0].mxu0
  %v250 = vadd.f32 %v141, %v249
  %v251 = vpop.f32.mrb[0].mxu0
  %v252 = vpop.f32.mrb[0].mxu0
  %v253 = vadd.f32 %v144, %v252
  %v254 = vpop.f32.mrb[0].mxu0
  %255 = vmatprep.mubr.bf16.mxu0 0
  %256 = vmatmul.mubr.bf16.gmra.mrb[0].mxu0 %v197
  %v257 = vpop.f32.mrb[0].mxu0
  %v258 = vadd.f32 %v149, %v257
  %v259 = vpop.f32.mrb[0].mxu0
  %v260 = vpop.f32.mrb[0].mxu0
  %v261 = vadd.f32 %v152, %v260
  %v262 = vpop.f32.mrb[0].mxu0
  %263 = vdwg.mxu0
  %v264 = vld [vmem:[%s4] sm:$0x1]
  %v266 = vlaneseq
  %v267 = vshrl.u32 %v266, 7
  %v268 = vsub.s32 0, %v267
  %v269 = vrot.slane %v264, %v268
  %v271 = vadd.f32 %v234, %v269
  %v272 = vadd.f32 %v237, %v269
  %v273 = vadd.f32 %v242, %v269
  %v274 = vadd.f32 %v245, %v269
  %v275 = vadd.f32 %v250, %v269
  %v276 = vadd.f32 %v253, %v269
  %v277 = vadd.f32 %v258, %v269
  %v278 = vadd.f32 %v261, %v269
  %279 = vst.msk [vmem:[%s5] sm:$0xff] %vm77, %v271
  %280 = vst.msk [vmem:[%s5 + $0x8] sm:$0xff] %vm77, %v272
  %281 = vst.msk [vmem:[%s5 + $0x10] sm:$0xff] %vm77, %v273
  %282 = vst.msk [vmem:[%s5 + $0x18] sm:$0xff] %vm77, %v274
  %283 = vst.msk [vmem:[%s5 + $0x20] sm:$0xff] %vm77, %v275
  %284 = vst.msk [vmem:[%s5 + $0x28] sm:$0xff] %vm77, %v276
  %285 = vst.msk [vmem:[%s5 + $0x30] sm:$0xff] %vm77, %v277
  %286 = vst.msk [vmem:[%s5 + $0x38] sm:$0xff] %vm77, %v278
  // Predicated region
  $region22: #{blstm_forward.9} parent=0 // pred_check
    _
  $region23: #{blstm_forward.9} parent=0 // pred_check_branch
    %288 = sbr.rel (0) target = $region25
  $region24: #{blstm_forward.9} parent=0 // pred_region
    _
  $region25: #{blstm_forward.9} parent=0 // pred_fallthru
    _
  // Predicated region
  $region26: #{blstm_forward.9} parent=0 // pred_check
    _
  $region27: #{blstm_forward.9} parent=0 // pred_check_branch
    %290 = sbr.rel (0) target = $region29
  $region28: #{blstm_forward.9} parent=0 // pred_region
    _
  $region29: #{blstm_forward.9} parent=0 // pred_fallthru
    _

// kernel: blstm_forward.6
$region0: #{blstm_forward.6}
  #allocation0 [shape = 'u32[]', space=smem, size = 0x4, offset = 0x4, fixed_abs, tag = 'smem constant byte address 0x4 - core index']
  #allocation1 [shape = 'u32[144,128]{1,0:T(1,128)}', space=vmem, size = 0x12000, scoped, tag = 'internal scratch']
  #allocation2 [shape = 'f32[8,64]{1,0:T(8,128)}', space=vmem, size = 0x1000, scoped, tag = 'scratch operand']
  #allocation3 [shape = 'f32[8,64]{1,0:T(8,128)}', space=vmem, size = 0x1000, scoped, tag = 'scratch operand']
  %s0 = inlined_call_operand.vmem [shape: bf16[8,8,256], index: 0, kind: input, shape index: {}, may-alias: {0,1}]
  %s1 = inlined_call_operand.vmem [shape: bf16[8,8,256], index: 1, kind: input, shape index: {}, may-alias: {0,1}]
  %s2 = inlined_call_operand.vmem [shape: s32[8,256], index: 2, kind: input, shape index: {}]
  %s3 = inlined_call_operand.vmem [shape: bf16[64,256], index: 3, kind: input, shape index: {}]
  %s4 = inlined_call_operand.vmem [shape: f32[8,64], index: 4, kind: input, shape index: {}, may-alias: {4,5}]
  %s5 = inlined_call_operand.vmem [shape: f32[8,64], index: 5, kind: input, shape index: {}, may-alias: {4,5}]
  %s6 = inlined_call_operand.vmem [shape: bf16[8,8,32], index: 6, kind: output, shape index: {0}]
  %s7 = inlined_call_operand.vmem [shape: bf16[8,8,32], index: 7, kind: output, shape index: {1}]
  %s8 = inlined_call_operand.vmem [shape: f32[8,64], index: 8, kind: output, shape index: {2}]
  %s9 = inlined_call_operand.vmem [shape: f32[8,64], index: 9, kind: output, shape index: {3}]
  %10 = xla_tuple %s6, %s7, %s8, %s9
  %s11 = sld [smem:[#allocation0]]
  $region62: #{blstm_forward.6} parent=0
    _
  %s13 = ssub.s32 1, %s11
  %s14 = scalar_select 0, %s13, %s11
  // Predicated region
  $region2: #{blstm_forward.6} parent=0 // pred_check
    _
  $region3: #{blstm_forward.6} parent=0 // pred_check_branch
    %16 = sbr.rel (0) target = $region5
  $region4: #{blstm_forward.6} parent=0 // pred_region
    _
  $region5: #{blstm_forward.6} parent=0 // pred_fallthru
    _
  // Predicated region
  $region6: #{blstm_forward.6} parent=0 // pred_check
    _
  $region7: #{blstm_forward.6} parent=0 // pred_check_branch
    %18 = sbr.rel (0) target = $region9
  $region8: #{blstm_forward.6} parent=0 // pred_region
    %s19 = ssub.s32 0, 0
    %s20 = smul.u32 8, %s19
    %p21 = scmp.lt.s32.totalorder %s20, 7
    %s22 = scalar_select %p21, %s20, 7
    %s23 = smul.addr %s22, 2
    %s24 = smul.addr %s23, 4
    %s25 = scalar_lea.vmem %s1, %s24
    %s26 = ssub.s32 0, 0
    %s27 = smul.u32 8, %s26
  $region9: #{blstm_forward.6} parent=0 // pred_fallthru
    _
  // Predicated region
  $region10: #{blstm_forward.6} parent=0 // pred_check
    _
  $region11: #{blstm_forward.6} parent=0 // pred_check_branch
    %29 = sbr.rel (0) target = $region13
  $region12: #{blstm_forward.6} parent=0 // pred_region
    _
  $region13: #{blstm_forward.6} parent=0 // pred_fallthru
    _
  // Predicated region
  $region14: #{blstm_forward.6} parent=0 // pred_check
    _
  $region15: #{blstm_forward.6} parent=0 // pred_check_branch
    %31 = sbr.rel (0) target = $region17
  $region16: #{blstm_forward.6} parent=0 // pred_region
    _
  $region17: #{blstm_forward.6} parent=0 // pred_fallthru
    _
  // Predicated region
  $region18: #{blstm_forward.6} parent=0 // pred_check
    _
  $region19: #{blstm_forward.6} parent=0 // pred_check_branch
    %33 = sbr.rel (0) target = $region21
  $region20: #{blstm_forward.6} parent=0 // pred_region
    _
  $region21: #{blstm_forward.6} parent=0 // pred_fallthru
    _
  // Predicated region
  $region22: #{blstm_forward.6} parent=0 // pred_check
    _
  $region23: #{blstm_forward.6} parent=0 // pred_check_branch
    %35 = sbr.rel (0) target = $region25
  $region24: #{blstm_forward.6} parent=0 // pred_region
    _
  $region25: #{blstm_forward.6} parent=0 // pred_fallthru
    _
  %s36 = ssub.s32 0, 0
  %s37 = smul.u32 8, %s36
  %p38 = scmp.lt.s32.totalorder %s37, 7
  %s39 = scalar_select %p38, %s37, 7
  %s40 = smul.addr %s39, 2
  %s41 = smul.addr %s40, 4
  %s42 = scalar_lea.vmem %s1, %s41
  %s43 = ssub.s32 0, 0
  %s44 = smul.u32 8, %s43
  %p45 = scmp.lt.s32.totalorder %s44, 7
  %s46 = scalar_select %p45, %s44, 7
  %s47 = smul.addr %s46, 4
  %s48 = scalar_lea.vmem %s7, %s47
  %s49 = ssub.s32 0, 0
  %s50 = smul.u32 8, %s49
  %p51 = scmp.lt.s32.totalorder %s50, 7
  %s52 = scalar_select %p51, %s50, 7
  %s53 = smul.addr %s52, 2
  %s54 = smul.addr %s53, 4
  %s55 = scalar_lea.vmem %s1, %s54
  %s56 = ssub.s32 0, 0
  %s57 = smul.u32 8, %s56
  %s58 = ssub.s32 0, 0
  %s59 = smul.u32 8, %s58
  %p60 = scmp.lt.s32.totalorder %s59, 7
  %s61 = scalar_select %p60, %s59, 7
  %s62 = smul.addr %s61, 4
  %s63 = scalar_lea.vmem %s7, %s62
  %s64 = ssub.s32 0, 0
  %s65 = smul.u32 8, %s64
  %p67 = scmp.eq.s32.totalorder 0, 0
  // Predicated region
  $region26: #{blstm_forward.6} parent=0 // pred_check
    %p68 = pneg %p67
  $region27: #{blstm_forward.6} parent=0 // pred_check_branch
    %70 = sbr.rel (%p68) target = $region29
  $region28: #{blstm_forward.6} parent=0 // pred_region
    %v71 = vld [vmem:[%s4] sm:$0xff]
    %vm72 = vcmask 523264
    %73 = vst.msk [vmem:[#allocation2] sm:$0xff] %vm72, %v71
    %v74 = vld [vmem:[%s5] sm:$0xff]
    %75 = vst.msk [vmem:[#allocation3] sm:$0xff] %vm72, %v74
  $region29: #{blstm_forward.6} parent=0 // pred_fallthru
    _
  %v76 = vld [vmem:[%s3] sm:$0xff]
  %v77 = vld [vmem:[%s3 + $0x8] sm:$0xff]
  %v78 = vld [vmem:[%s3 + $0x10] sm:$0xff]
  %v79 = vld [vmem:[%s3 + $0x18] sm:$0xff]
  %v80 = vld [vmem:[%s3 + $0x20] sm:$0xff]
  %v81 = vld [vmem:[%s3 + $0x28] sm:$0xff]
  %v82 = vld [vmem:[%s3 + $0x30] sm:$0xff]
  %v83 = vld [vmem:[%s3 + $0x38] sm:$0xff]
  %v84 = vld [vmem:[%s2] sm:$0xff]
  %v85 = vld [vmem:[%s2 + $0x8] sm:$0xff]
  %vm86 = vcmp.ne.s32.totalorder %v84, 0
  %vm87 = vcmp.ne.s32.totalorder %v85, 0
  %v88 = vld [vmem:[#allocation2] sm:$0xff]
  %v89 = vld [vmem:[#allocation3] sm:$0xff]
  %v90 = vpack.c.bf16 %v88, %v88
  %v91 = vld [vmem:[%s0] sm:$0xff]
  %s92 = scalar_lea.vmem %s55, 56
  %v93 = vld [vmem:[%s92] sm:$0xff]
  %vm94 = vmpackc.low %vm87, %vm86
  %v95 = vsel %vm94, %v91, %v93
  %v96 = vunpack.c.l.bf16 %v95
  %v97 = vunpack.c.h.bf16 %v95
  %v106 = vunpack.c.l.b16 %v76
  %v107 = vunpack.c.h.b16 %v76
  %v108 = vunpack.c.l.b16 %v77
  %v109 = vunpack.c.h.b16 %v77
  %v110 = vunpack.c.l.b16 %v78
  %v111 = vunpack.c.h.b16 %v78
  %v112 = vunpack.c.l.b16 %v79
  %v113 = vunpack.c.h.b16 %v79
  %v114 = vunpack.c.l.b16 %v80
  %v115 = vunpack.c.h.b16 %v80
  %v116 = vunpack.c.l.b16 %v81
  %v117 = vunpack.c.h.b16 %v81
  %v118 = vunpack.c.l.b16 %v82
  %v119 = vunpack.c.h.b16 %v82
  %v120 = vunpack.c.l.b16 %v83
  %v121 = vunpack.c.h.b16 %v83
  %v122 = vpack.c.b16 %v108, %v106
  %v123 = vpack.c.b16 %v109, %v107
  %v124 = vpack.c.b16 %v112, %v110
  %v125 = vpack.c.b16 %v113, %v111
  %v126 = vpack.c.b16 %v116, %v114
  %v127 = vpack.c.b16 %v117, %v115
  %v128 = vpack.c.b16 %v120, %v118
  %v129 = vpack.c.b16 %v121, %v119
  %vm138 = vcmask 523264
  %v140 = vsel %vm138, %v90, 0
  %142 = vmatprep.subr.bf16.mxu0 %v123
  %143 = vmatpush1.bf16.msra.mxu0 %v122
  %144 = vmatprep.subr.bf16.mxu0 %v125
  %145 = vmatpush1.bf16.msra.mxu0 %v124
  %146 = vmatprep.subr.bf16.mxu0 %v127
  %147 = vmatpush1.bf16.msra.mxu0 %v126
  %148 = vmatprep.subr.bf16.mxu0 %v129
  %149 = vmatpush1.bf16.msra.mxu0 %v128
  %150 = vmatprep.subr.bf16.mxu0 0
  %151 = vmatpush1.bf16.msra.mxu0 0
  %152 = vmatprep.subr.bf16.mxu0 0
  %153 = vmatpush1.bf16.msra.mxu0 0
  %154 = vmatprep.subr.bf16.mxu0 0
  %155 = vmatpush1.bf16.msra.mxu0 0
  %156 = vmatprep.subr.bf16.mxu0 0
  %157 = vmatpush1.bf16.msra.mxu0 0
  %158 = vmatprep.subr.bf16.mxu0 0
  %159 = vmatpush1.bf16.msra.mxu0 0
  %160 = vmatprep.subr.bf16.mxu0 0
  %161 = vmatpush1.bf16.msra.mxu0 0
  %162 = vmatprep.subr.bf16.mxu0 0
  %163 = vmatpush1.bf16.msra.mxu0 0
  %164 = vmatprep.subr.bf16.mxu0 0
  %165 = vmatpush1.bf16.msra.mxu0 0
  %166 = vmatprep.subr.bf16.mxu0 0
  %167 = vmatpush1.bf16.msra.mxu0 0
  %168 = vmatprep.subr.bf16.mxu0 0
  %169 = vmatpush1.bf16.msra.mxu0 0
  %170 = vmatprep.subr.bf16.mxu0 0
  %171 = vmatpush1.bf16.msra.mxu0 0
  %172 = vmatprep.subr.bf16.mxu0 0
  %173 = vmatpush1.bf16.msra.mxu0 0
  %174 = vmatprep.mubr.bf16.mxu0 0
  %175 = vmatmul.mubr.bf16.gmra.mrb[0].mxu0 %v140
  %v176 = vpop.f32.mrb[0].mxu0
  %v177 = vadd.f32 %v96, %v176
  %v178 = vpop.f32.mrb[0].mxu0
  %v179 = vadd.f32 %v97, %v178
  %v180 = vpop.f32.mrb[0].mxu0
  %v181 = vpop.f32.mrb[0].mxu0
  %182 = vdwg.mxu0
  %v183 = vxor.u32 %v177, 2147483648
  %v184 = vmul.f32 %v183, 1.442695
  %v185 = vpow.pop %v184
  %v186 = vadd.f32 %v185, 1.0
  %v187 = vrcp.pop %v186
  %v188 = vmul.f32 1.0, %v187
  %v189 = vtanh.pop %v179
  %v190 = vxor.u32 %v179, 2147483648
  %v191 = vmul.f32 %v190, 1.442695
  %v192 = vpow.pop %v191
  %v193 = vadd.f32 %v192, 1.0
  %v194 = vrcp.pop %v193
  %v195 = vmul.f32 1.0, %v194
  %197 = vrot.lane.b32.xlu0 %v89, 64
  %v198 = vpop.permute.xlu0 %197
  %v200 = vmul.f32 %v188, %v198
  %v201 = vmul.f32 %v188, %v189
  %203 = vrot.lane.b32.xlu0 %v201, 64
  %v204 = vpop.permute.xlu0 %203
  %v206 = vadd.f32 %v200, %v204
  %v207 = vtanh.pop %v206
  %v208 = vmul.f32 %v195, %v207
  %v209 = vpack.c.bf16 %v208, %v208
  %v211 = vunpack.c.l.b16 %v209
  %v212 = vpack.c.b16 %v211, %v211
  %213 = vrot.lane.b32.xlu0 %v212, 64
  %v214 = vpop.permute.xlu0 %213
  %vm216 = vcmask 257024
  %217 = vst.msk [vmem:[%s6] sm:$0xf] %vm216, %v214
  %218 = vrot.lane.b32.xlu0 %v212, 32
  %v219 = vpop.permute.xlu0 %218
  %s221 = scalar_lea.vmem %s63, 28
  %222 = vst.msk [vmem:[%s221] sm:$0xf] %vm216, %v219
  %s223 = scalar_lea.vmem %s0, 8
  %v224 = vld [vmem:[%s223] sm:$0xff]
  %s225 = scalar_lea.vmem %s55, 48
  %v226 = vld [vmem:[%s225] sm:$0xff]
  %v227 = vsel %vm94, %v224, %v226
  %v228 = vunpack.c.l.bf16 %v227
  %v229 = vunpack.c.h.bf16 %v227
  %230 = vrot.lane.b32.xlu0 %v209, 64
  %v231 = vpop.permute.xlu0 %230
  %v233 = vsel %vm138, %v231, 0
  %235 = vmatprep.subr.bf16.mxu0 %v123
  %236 = vmatpush1.bf16.msra.mxu0 %v122
  %237 = vmatprep.subr.bf16.mxu0 %v125
  %238 = vmatpush1.bf16.msra.mxu0 %v124
  %239 = vmatprep.subr.bf16.mxu0 %v127
  %240 = vmatpush1.bf16.msra.mxu0 %v126
  %241 = vmatprep.subr.bf16.mxu0 %v129
  %242 = vmatpush1.bf16.msra.mxu0 %v128
  %243 = vmatprep.subr.bf16.mxu0 0
  %244 = vmatpush1.bf16.msra.mxu0 0
  %245 = vmatprep.subr.bf16.mxu0 0
  %246 = vmatpush1.bf16.msra.mxu0 0
  %247 = vmatprep.subr.bf16.mxu0 0
  %248 = vmatpush1.bf16.msra.mxu0 0
  %249 = vmatprep.subr.bf16.mxu0 0
  %250 = vmatpush1.bf16.msra.mxu0 0
  %251 = vmatprep.subr.bf16.mxu0 0
  %252 = vmatpush1.bf16.msra.mxu0 0
  %253 = vmatprep.subr.bf16.mxu0 0
  %254 = vmatpush1.bf16.msra.mxu0 0
  %255 = vmatprep.subr.bf16.mxu0 0
  %256 = vmatpush1.bf16.msra.mxu0 0
  %257 = vmatprep.subr.bf16.mxu0 0
  %258 = vmatpush1.bf16.msra.mxu0 0
  %259 = vmatprep.subr.bf16.mxu0 0
  %260 = vmatpush1.bf16.msra.mxu0 0
  %261 = vmatprep.subr.bf16.mxu0 0
  %262 = vmatpush1.bf16.msra.mxu0 0
  %263 = vmatprep.subr.bf16.mxu0 0
  %264 = vmatpush1.bf16.msra.mxu0 0
  %265 = vmatprep.subr.bf16.mxu0 0
  %266 = vmatpush1.bf16.msra.mxu0 0
  %267 = vmatprep.mubr.bf16.mxu0 0
  %268 = vmatmul.mubr.bf16.gmra.mrb[0].mxu0 %v233
  %v269 = vpop.f32.mrb[0].mxu0
  %v270 = vadd.f32 %v228, %v269
  %v271 = vpop.f32.mrb[0].mxu0
  %v272 = vadd.f32 %v229, %v271
  %v273 = vpop.f32.mrb[0].mxu0
  %v274 = vpop.f32.mrb[0].mxu0
  %275 = vdwg.mxu0
  %v276 = vxor.u32 %v270, 2147483648
  %v277 = vmul.f32 %v276, 1.442695
  %v278 = vpow.pop %v277
  %v279 = vadd.f32 %v278, 1.0
  %v280 = vrcp.pop %v279
  %v281 = vmul.f32 1.0, %v280
  %v282 = vtanh.pop %v272
  %v283 = vxor.u32 %v272, 2147483648
  %v284 = vmul.f32 %v283, 1.442695
  %v285 = vpow.pop %v284
  %v286 = vadd.f32 %v285, 1.0
  %v287 = vrcp.pop %v286
  %v288 = vmul.f32 1.0, %v287
  %v289 = vmul.f32 %v281, %v206
  %v290 = vmul.f32 %v281, %v282
  %292 = vrot.lane.b32.xlu0 %v290, 64
  %v293 = vpop.permute.xlu0 %292
  %v295 = vadd.f32 %v289, %v293
  %v296 = vtanh.pop %v295
  %v297 = vmul.f32 %v288, %v296
  %v298 = vpack.c.bf16 %v297, %v297
  %v300 = vunpack.c.l.b16 %v298
  %v301 = vpack.c.b16 %v300, %v300
  %302 = vrot.lane.b32.xlu0 %v301, 64
  %v303 = vpop.permute.xlu0 %302
  %s305 = scalar_lea.vmem %s6, 4
  %306 = vst.msk [vmem:[%s305] sm:$0xf] %vm216, %v303
  %307 = vrot.lane.b32.xlu0 %v301, 32
  %v308 = vpop.permute.xlu0 %307
  %s310 = scalar_lea.vmem %s63, 24
  %311 = vst.msk [vmem:[%s310] sm:$0xf] %vm216, %v308
  %s312 = scalar_lea.vmem %s0, 16
  %v313 = vld [vmem:[%s312] sm:$0xff]
  %s314 = scalar_lea.vmem %s55, 40
  %v315 = vld [vmem:[%s314] sm:$0xff]
  %v316 = vsel %vm94, %v313, %v315
  %v317 = vunpack.c.l.bf16 %v316
  %v318 = vunpack.c.h.bf16 %v316
  %319 = vrot.lane.b32.xlu0 %v298, 64
  %v320 = vpop.permute.xlu0 %319
  %v322 = vsel %vm138, %v320, 0
  %324 = vmatprep.subr.bf16.mxu0 %v123
  %325 = vmatpush1.bf16.msra.mxu0 %v122
  %326 = vmatprep.subr.bf16.mxu0 %v125
  %327 = vmatpush1.bf16.msra.mxu0 %v124
  %328 = vmatprep.subr.bf16.mxu0 %v127
  %329 = vmatpush1.bf16.msra.mxu0 %v126
  %330 = vmatprep.subr.bf16.mxu0 %v129
  %331 = vmatpush1.bf16.msra.mxu0 %v128
  %332 = vmatprep.subr.bf16.mxu0 0
  %333 = vmatpush1.bf16.msra.mxu0 0
  %334 = vmatprep.subr.bf16.mxu0 0
  %335 = vmatpush1.bf16.msra.mxu0 0
  %336 = vmatprep.subr.bf16.mxu0 0
  %337 = vmatpush1.bf16.msra.mxu0 0
  %338 = vmatprep.subr.bf16.mxu0 0
  %339 = vmatpush1.bf16.msra.mxu0 0
  %340 = vmatprep.subr.bf16.mxu0 0
  %341 = vmatpush1.bf16.msra.mxu0 0
  %342 = vmatprep.subr.bf16.mxu0 0
  %343 = vmatpush1.bf16.msra.mxu0 0
  %344 = vmatprep.subr.bf16.mxu0 0
  %345 = vmatpush1.bf16.msra.mxu0 0
  %346 = vmatprep.subr.bf16.mxu0 0
  %347 = vmatpush1.bf16.msra.mxu0 0
  %348 = vmatprep.subr.bf16.mxu0 0
  %349 = vmatpush1.bf16.msra.mxu0 0
  %350 = vmatprep.subr.bf16.mxu0 0
  %351 = vmatpush1.bf16.msra.mxu0 0
  %352 = vmatprep.subr.bf16.mxu0 0
  %353 = vmatpush1.bf16.msra.mxu0 0
  %354 = vmatprep.subr.bf16.mxu0 0
  %355 = vmatpush1.bf16.msra.mxu0 0
  %356 = vmatprep.mubr.bf16.mxu0 0
  %357 = vmatmul.mubr.bf16.gmra.mrb[0].mxu0 %v322
  %v358 = vpop.f32.mrb[0].mxu0
  %v359 = vadd.f32 %v317, %v358
  %v360 = vpop.f32.mrb[0].mxu0
  %v361 = vadd.f32 %v318, %v360
  %v362 = vpop.f32.mrb[0].mxu0
  %v363 = vpop.f32.mrb[0].mxu0
  %364 = vdwg.mxu0
  %v365 = vxor.u32 %v359, 2147483648
  %v366 = vmul.f32 %v365, 1.442695
  %v367 = vpow.pop %v366
  %v368 = vadd.f32 %v367, 1.0
  %v369 = vrcp.pop %v368
  %v370 = vmul.f32 1.0, %v369
  %v371 = vtanh.pop %v361
  %v372 = vxor.u32 %v361, 2147483648
  %v373 = vmul.f32 %v372, 1.442695
  %v374 = vpow.pop %v373
  %v375 = vadd.f32 %v374, 1.0
  %v376 = vrcp.pop %v375
  %v377 = vmul.f32 1.0, %v376
  %v378 = vmul.f32 %v370, %v295
  %v379 = vmul.f32 %v370, %v371
  %381 = vrot.lane.b32.xlu0 %v379, 64
  %v382 = vpop.permute.xlu0 %381
  %v384 = vadd.f32 %v378, %v382
  %v385 = vtanh.pop %v384
  %v386 = vmul.f32 %v377, %v385
  %v387 = vpack.c.bf16 %v386, %v386
  %v389 = vunpack.c.l.b16 %v387
  %v390 = vpack.c.b16 %v389, %v389
  %391 = vrot.lane.b32.xlu0 %v390, 64
  %v392 = vpop.permute.xlu0 %391
  %s394 = scalar_lea.vmem %s6, 8
  %395 = vst.msk [vmem:[%s394] sm:$0xf] %vm216, %v392
  %396 = vrot.lane.b32.xlu0 %v390, 32
  %v397 = vpop.permute.xlu0 %396
  %s399 = scalar_lea.vmem %s63, 20
  %400 = vst.msk [vmem:[%s399] sm:$0xf] %vm216, %v397
  %s401 = scalar_lea.vmem %s0, 24
  %v402 = vld [vmem:[%s401] sm:$0xff]
  %s403 = scalar_lea.vmem %s55, 32
  %v404 = vld [vmem:[%s403] sm:$0xff]
  %v405 = vsel %vm94, %v402, %v404
  %v406 = vunpack.c.l.bf16 %v405
  %v407 = vunpack.c.h.bf16 %v405
  %408 = vrot.lane.b32.xlu0 %v387, 64
  %v409 = vpop.permute.xlu0 %408
  %v411 = vsel %vm138, %v409, 0
  %413 = vmatprep.subr.bf16.mxu0 %v123
  %414 = vmatpush1.bf16.msra.mxu0 %v122
  %415 = vmatprep.subr.bf16.mxu0 %v125
  %416 = vmatpush1.bf16.msra.mxu0 %v124
  %417 = vmatprep.subr.bf16.mxu0 %v127
  %418 = vmatpush1.bf16.msra.mxu0 %v126
  %419 = vmatprep.subr.bf16.mxu0 %v129
  %420 = vmatpush1.bf16.msra.mxu0 %v128
  %421 = vmatprep.subr.bf16.mxu0 0
  %422 = vmatpush1.bf16.msra.mxu0 0
  %423 = vmatprep.subr.bf16.mxu0 0
  %424 = vmatpush1.bf16.msra.mxu0 0
  %425 = vmatprep.subr.bf16.mxu0 0
  %426 = vmatpush1.bf16.msra.mxu0 0
  %427 = vmatprep.subr.bf16.mxu0 0
  %428 = vmatpush1.bf16.msra.mxu0 0
  %429 = vmatprep.subr.bf16.mxu0 0
  %430 = vmatpush1.bf16.msra.mxu0 0
  %431 = vmatprep.subr.bf16.mxu0 0
  %432 = vmatpush1.bf16.msra.mxu0 0
  %433 = vmatprep.subr.bf16.mxu0 0
  %434 = vmatpush1.bf16.msra.mxu0 0
  %435 = vmatprep.subr.bf16.mxu0 0
  %436 = vmatpush1.bf16.msra.mxu0 0
  %437 = vmatprep.subr.bf16.mxu0 0
  %438 = vmatpush1.bf16.msra.mxu0 0
  %439 = vmatprep.subr.bf16.mxu0 0
  %440 = vmatpush1.bf16.msra.mxu0 0
  %441 = vmatprep.subr.bf16.mxu0 0
  %442 = vmatpush1.bf16.msra.mxu0 0
  %443 = vmatprep.subr.bf16.mxu0 0
  %444 = vmatpush1.bf16.msra.mxu0 0
  %445 = vmatprep.mubr.bf16.mxu0 0
  %446 = vmatmul.mubr.bf16.gmra.mrb[0].mxu0 %v411
  %v447 = vpop.f32.mrb[0].mxu0
  %v448 = vadd.f32 %v406, %v447
  %v449 = vpop.f32.mrb[0].mxu0
  %v450 = vadd.f32 %v407, %v449
  %v451 = vpop.f32.mrb[0].mxu0
  %v452 = vpop.f32.mrb[0].mxu0
  %453 = vdwg.mxu0
  %v454 = vxor.u32 %v448, 2147483648
  %v455 = vmul.f32 %v454, 1.442695
  %v456 = vpow.pop %v455
  %v457 = vadd.f32 %v456, 1.0
  %v458 = vrcp.pop %v457
  %v459 = vmul.f32 1.0, %v458
  %v460 = vtanh.pop %v450
  %v461 = vxor.u32 %v450, 2147483648
  %v462 = vmul.f32 %v461, 1.442695
  %v463 = vpow.pop %v462
  %v464 = vadd.f32 %v463, 1.0
  %v465 = vrcp.pop %v464
  %v466 = vmul.f32 1.0, %v465
  %v467 = vmul.f32 %v459, %v384
  %v468 = vmul.f32 %v459, %v460
  %470 = vrot.lane.b32.xlu0 %v468, 64
  %v471 = vpop.permute.xlu0 %470
  %v473 = vadd.f32 %v467, %v471
  %v474 = vtanh.pop %v473
  %v475 = vmul.f32 %v466, %v474
  %v476 = vpack.c.bf16 %v475, %v475
  %v478 = vunpack.c.l.b16 %v476
  %v479 = vpack.c.b16 %v478, %v478
  %480 = vrot.lane.b32.xlu0 %v479, 64
  %v481 = vpop.permute.xlu0 %480
  %s483 = scalar_lea.vmem %s6, 12
  %484 = vst.msk [vmem:[%s483] sm:$0xf] %vm216, %v481
  %485 = vrot.lane.b32.xlu0 %v479, 32
  %v486 = vpop.permute.xlu0 %485
  %s488 = scalar_lea.vmem %s63, 16
  %489 = vst.msk [vmem:[%s488] sm:$0xf] %vm216, %v486
  %s490 = scalar_lea.vmem %s0, 32
  %v491 = vld [vmem:[%s490] sm:$0xff]
  %s492 = scalar_lea.vmem %s55, 24
  %v493 = vld [vmem:[%s492] sm:$0xff]
  %v494 = vsel %vm94, %v491, %v493
  %v495 = vunpack.c.l.bf16 %v494
  %v496 = vunpack.c.h.bf16 %v494
  %497 = vrot.lane.b32.xlu0 %v476, 64
  %v498 = vpop.permute.xlu0 %497
  %v500 = vsel %vm138, %v498, 0
  %502 = vmatprep.subr.bf16.mxu0 %v123
  %503 = vmatpush1.bf16.msra.mxu0 %v122
  %504 = vmatprep.subr.bf16.mxu0 %v125
  %505 = vmatpush1.bf16.msra.mxu0 %v124
  %506 = vmatprep.subr.bf16.mxu0 %v127
  %507 = vmatpush1.bf16.msra.mxu0 %v126
  %508 = vmatprep.subr.bf16.mxu0 %v129
  %509 = vmatpush1.bf16.msra.mxu0 %v128
  %510 = vmatprep.subr.bf16.mxu0 0
  %511 = vmatpush1.bf16.msra.mxu0 0
  %512 = vmatprep.subr.bf16.mxu0 0
  %513 = vmatpush1.bf16.msra.mxu0 0
  %514 = vmatprep.subr.bf16.mxu0 0
  %515 = vmatpush1.bf16.msra.mxu0 0
  %516 = vmatprep.subr.bf16.mxu0 0
  %517 = vmatpush1.bf16.msra.mxu0 0
  %518 = vmatprep.subr.bf16.mxu0 0
  %519 = vmatpush1.bf16.msra.mxu0 0
  %520 = vmatprep.subr.bf16.mxu0 0
  %521 = vmatpush1.bf16.msra.mxu0 0
  %522 = vmatprep.subr.bf16.mxu0 0
  %523 = vmatpush1.bf16.msra.mxu0 0
  %524 = vmatprep.subr.bf16.mxu0 0
  %525 = vmatpush1.bf16.msra.mxu0 0
  %526 = vmatprep.subr.bf16.mxu0 0
  %527 = vmatpush1.bf16.msra.mxu0 0
  %528 = vmatprep.subr.bf16.mxu0 0
  %529 = vmatpush1.bf16.msra.mxu0 0
  %530 = vmatprep.subr.bf16.mxu0 0
  %531 = vmatpush1.bf16.msra.mxu0 0
  %532 = vmatprep.subr.bf16.mxu0 0
  %533 = vmatpush1.bf16.msra.mxu0 0
  %534 = vmatprep.mubr.bf16.mxu0 0
  %535 = vmatmul.mubr.bf16.gmra.mrb[0].mxu0 %v500
  %v536 = vpop.f32.mrb[0].mxu0
  %v537 = vadd.f32 %v495, %v536
  %v538 = vpop.f32.mrb[0].mxu0
  %v539 = vadd.f32 %v496, %v538
  %v540 = vpop.f32.mrb[0].mxu0
  %v541 = vpop.f32.mrb[0].mxu0
  %542 = vdwg.mxu0
  %v543 = vxor.u32 %v537, 2147483648
  %v544 = vmul.f32 %v543, 1.442695
  %v545 = vpow.pop %v544
  %v546 = vadd.f32 %v545, 1.0
  %v547 = vrcp.pop %v546
  %v548 = vmul.f32 1.0, %v547
  %v549 = vtanh.pop %v539
  %v550 = vxor.u32 %v539, 2147483648
  %v551 = vmul.f32 %v550, 1.442695
  %v552 = vpow.pop %v551
  %v553 = vadd.f32 %v552, 1.0
  %v554 = vrcp.pop %v553
  %v555 = vmul.f32 1.0, %v554
  %v556 = vmul.f32 %v548, %v473
  %v557 = vmul.f32 %v548, %v549
  %559 = vrot.lane.b32.xlu0 %v557, 64
  %v560 = vpop.permute.xlu0 %559
  %v562 = vadd.f32 %v556, %v560
  %v563 = vtanh.pop %v562
  %v564 = vmul.f32 %v555, %v563
  %v565 = vpack.c.bf16 %v564, %v564
  %v567 = vunpack.c.l.b16 %v565
  %v568 = vpack.c.b16 %v567, %v567
  %569 = vrot.lane.b32.xlu0 %v568, 64
  %v570 = vpop.permute.xlu0 %569
  %s572 = scalar_lea.vmem %s6, 16
  %573 = vst.msk [vmem:[%s572] sm:$0xf] %vm216, %v570
  %574 = vrot.lane.b32.xlu0 %v568, 32
  %v575 = vpop.permute.xlu0 %574
  %s577 = scalar_lea.vmem %s63, 12
  %578 = vst.msk [vmem:[%s577] sm:$0xf] %vm216, %v575
  %s579 = scalar_lea.vmem %s0, 40
  %v580 = vld [vmem:[%s579] sm:$0xff]
  %s581 = scalar_lea.vmem %s55, 16
  %v582 = vld [vmem:[%s581] sm:$0xff]
  %v583 = vsel %vm94, %v580, %v582
  %v584 = vunpack.c.l.bf16 %v583
  %v585 = vunpack.c.h.bf16 %v583
  %586 = vrot.lane.b32.xlu0 %v565, 64
  %v587 = vpop.permute.xlu0 %586
  %v589 = vsel %vm138, %v587, 0
  %591 = vmatprep.subr.bf16.mxu0 %v123
  %592 = vmatpush1.bf16.msra.mxu0 %v122
  %593 = vmatprep.subr.bf16.mxu0 %v125
  %594 = vmatpush1.bf16.msra.mxu0 %v124
  %595 = vmatprep.subr.bf16.mxu0 %v127
  %596 = vmatpush1.bf16.msra.mxu0 %v126
  %597 = vmatprep.subr.bf16.mxu0 %v129
  %598 = vmatpush1.bf16.msra.mxu0 %v128
  %599 = vmatprep.subr.bf16.mxu0 0
  %600 = vmatpush1.bf16.msra.mxu0 0
  %601 = vmatprep.subr.bf16.mxu0 0
  %602 = vmatpush1.bf16.msra.mxu0 0
  %603 = vmatprep.subr.bf16.mxu0 0
  %604 = vmatpush1.bf16.msra.mxu0 0
  %605 = vmatprep.subr.bf16.mxu0 0
  %606 = vmatpush1.bf16.msra.mxu0 0
  %607 = vmatprep.subr.bf16.mxu0 0
  %608 = vmatpush1.bf16.msra.mxu0 0
  %609 = vmatprep.subr.bf16.mxu0 0
  %610 = vmatpush1.bf16.msra.mxu0 0
  %611 = vmatprep.subr.bf16.mxu0 0
  %612 = vmatpush1.bf16.msra.mxu0 0
  %613 = vmatprep.subr.bf16.mxu0 0
  %614 = vmatpush1.bf16.msra.mxu0 0
  %615 = vmatprep.subr.bf16.mxu0 0
  %616 = vmatpush1.bf16.msra.mxu0 0
  %617 = vmatprep.subr.bf16.mxu0 0
  %618 = vmatpush1.bf16.msra.mxu0 0
  %619 = vmatprep.subr.bf16.mxu0 0
  %620 = vmatpush1.bf16.msra.mxu0 0
  %621 = vmatprep.subr.bf16.mxu0 0
  %622 = vmatpush1.bf16.msra.mxu0 0
  %623 = vmatprep.mubr.bf16.mxu0 0
  %624 = vmatmul.mubr.bf16.gmra.mrb[0].mxu0 %v589
  %v625 = vpop.f32.mrb[0].mxu0
  %v626 = vadd.f32 %v584, %v625
  %v627 = vpop.f32.mrb[0].mxu0
  %v628 = vadd.f32 %v585, %v627
  %v629 = vpop.f32.mrb[0].mxu0
  %v630 = vpop.f32.mrb[0].mxu0
  %631 = vdwg.mxu0
  %v632 = vxor.u32 %v626, 2147483648
  %v633 = vmul.f32 %v632, 1.442695
  %v634 = vpow.pop %v633
  %v635 = vadd.f32 %v634, 1.0
  %v636 = vrcp.pop %v635
  %v637 = vmul.f32 1.0, %v636
  %v638 = vtanh.pop %v628
  %v639 = vxor.u32 %v628, 2147483648
  %v640 = vmul.f32 %v639, 1.442695
  %v641 = vpow.pop %v640
  %v642 = vadd.f32 %v641, 1.0
  %v643 = vrcp.pop %v642
  %v644 = vmul.f32 1.0, %v643
  %v645 = vmul.f32 %v637, %v562
  %v646 = vmul.f32 %v637, %v638
  %648 = vrot.lane.b32.xlu0 %v646, 64
  %v649 = vpop.permute.xlu0 %648
  %v651 = vadd.f32 %v645, %v649
  %v652 = vtanh.pop %v651
  %v653 = vmul.f32 %v644, %v652
  %v654 = vpack.c.bf16 %v653, %v653
  %v656 = vunpack.c.l.b16 %v654
  %v657 = vpack.c.b16 %v656, %v656
  %658 = vrot.lane.b32.xlu0 %v657, 64
  %v659 = vpop.permute.xlu0 %658
  %s661 = scalar_lea.vmem %s6, 20
  %662 = vst.msk [vmem:[%s661] sm:$0xf] %vm216, %v659
  %663 = vrot.lane.b32.xlu0 %v657, 32
  %v664 = vpop.permute.xlu0 %663
  %s666 = scalar_lea.vmem %s63, 8
  %667 = vst.msk [vmem:[%s666] sm:$0xf] %vm216, %v664
  %s668 = scalar_lea.vmem %s0, 48
  %v669 = vld [vmem:[%s668] sm:$0xff]
  %s670 = scalar_lea.vmem %s55, 8
  %v671 = vld [vmem:[%s670] sm:$0xff]
  %v672 = vsel %vm94, %v669, %v671
  %v673 = vunpack.c.l.bf16 %v672
  %v674 = vunpack.c.h.bf16 %v672
  %675 = vrot.lane.b32.xlu0 %v654, 64
  %v676 = vpop.permute.xlu0 %675
  %v678 = vsel %vm138, %v676, 0
  %680 = vmatprep.subr.bf16.mxu0 %v123
  %681 = vmatpush1.bf16.msra.mxu0 %v122
  %682 = vmatprep.subr.bf16.mxu0 %v125
  %683 = vmatpush1.bf16.msra.mxu0 %v124
  %684 = vmatprep.subr.bf16.mxu0 %v127
  %685 = vmatpush1.bf16.msra.mxu0 %v126
  %686 = vmatprep.subr.bf16.mxu0 %v129
  %687 = vmatpush1.bf16.msra.mxu0 %v128
  %688 = vmatprep.subr.bf16.mxu0 0
  %689 = vmatpush1.bf16.msra.mxu0 0
  %690 = vmatprep.subr.bf16.mxu0 0
  %691 = vmatpush1.bf16.msra.mxu0 0
  %692 = vmatprep.subr.bf16.mxu0 0
  %693 = vmatpush1.bf16.msra.mxu0 0
  %694 = vmatprep.subr.bf16.mxu0 0
  %695 = vmatpush1.bf16.msra.mxu0 0
  %696 = vmatprep.subr.bf16.mxu0 0
  %697 = vmatpush1.bf16.msra.mxu0 0
  %698 = vmatprep.subr.bf16.mxu0 0
  %699 = vmatpush1.bf16.msra.mxu0 0
  %700 = vmatprep.subr.bf16.mxu0 0
  %701 = vmatpush1.bf16.msra.mxu0 0
  %702 = vmatprep.subr.bf16.mxu0 0
  %703 = vmatpush1.bf16.msra.mxu0 0
  %704 = vmatprep.subr.bf16.mxu0 0
  %705 = vmatpush1.bf16.msra.mxu0 0
  %706 = vmatprep.subr.bf16.mxu0 0
  %707 = vmatpush1.bf16.msra.mxu0 0
  %708 = vmatprep.subr.bf16.mxu0 0
  %709 = vmatpush1.bf16.msra.mxu0 0
  %710 = vmatprep.subr.bf16.mxu0 0
  %711 = vmatpush1.bf16.msra.mxu0 0
  %712 = vmatprep.mubr.bf16.mxu0 0
  %713 = vmatmul.mubr.bf16.gmra.mrb[0].mxu0 %v678
  %v714 = vpop.f32.mrb[0].mxu0
  %v715 = vadd.f32 %v673, %v714
  %v716 = vpop.f32.mrb[0].mxu0
  %v717 = vadd.f32 %v674, %v716
  %v718 = vpop.f32.mrb[0].mxu0
  %v719 = vpop.f32.mrb[0].mxu0
  %720 = vdwg.mxu0
  %v721 = vxor.u32 %v715, 2147483648
  %v722 = vmul.f32 %v721, 1.442695
  %v723 = vpow.pop %v722
  %v724 = vadd.f32 %v723, 1.0
  %v725 = vrcp.pop %v724
  %v726 = vmul.f32 1.0, %v725
  %v727 = vtanh.pop %v717
  %v728 = vxor.u32 %v717, 2147483648
  %v729 = vmul.f32 %v728, 1.442695
  %v730 = vpow.pop %v729
  %v731 = vadd.f32 %v730, 1.0
  %v732 = vrcp.pop %v731
  %v733 = vmul.f32 1.0, %v732
  %v734 = vmul.f32 %v726, %v651
  %v735 = vmul.f32 %v726, %v727
  %737 = vrot.lane.b32.xlu0 %v735, 64
  %v738 = vpop.permute.xlu0 %737
  %v740 = vadd.f32 %v734, %v738
  %v741 = vtanh.pop %v740
  %v742 = vmul.f32 %v733, %v741
  %v743 = vpack.c.bf16 %v742, %v742
  %v745 = vunpack.c.l.b16 %v743
  %v746 = vpack.c.b16 %v745, %v745
  %747 = vrot.lane.b32.xlu0 %v746, 64
  %v748 = vpop.permute.xlu0 %747
  %s750 = scalar_lea.vmem %s6, 24
  %751 = vst.msk [vmem:[%s750] sm:$0xf] %vm216, %v748
  %752 = vrot.lane.b32.xlu0 %v746, 32
  %v753 = vpop.permute.xlu0 %752
  %s755 = scalar_lea.vmem %s63, 4
  %756 = vst.msk [vmem:[%s755] sm:$0xf] %vm216, %v753
  %s757 = scalar_lea.vmem %s0, 56
  %v758 = vld [vmem:[%s757] sm:$0xff]
  %v759 = vld [vmem:[%s55] sm:$0xff]
  %v760 = vsel %vm94, %v758, %v759
  %v761 = vunpack.c.l.bf16 %v760
  %v762 = vunpack.c.h.bf16 %v760
  %763 = vrot.lane.b32.xlu0 %v743, 64
  %v764 = vpop.permute.xlu0 %763
  %v766 = vsel %vm138, %v764, 0
  %768 = vmatprep.subr.bf16.mxu0 %v123
  %769 = vmatpush1.bf16.msra.mxu0 %v122
  %770 = vmatprep.subr.bf16.mxu0 %v125
  %771 = vmatpush1.bf16.msra.mxu0 %v124
  %772 = vmatprep.subr.bf16.mxu0 %v127
  %773 = vmatpush1.bf16.msra.mxu0 %v126
  %774 = vmatprep.subr.bf16.mxu0 %v129
  %775 = vmatpush1.bf16.msra.mxu0 %v128
  %776 = vmatprep.subr.bf16.mxu0 0
  %777 = vmatpush1.bf16.msra.mxu0 0
  %778 = vmatprep.subr.bf16.mxu0 0
  %779 = vmatpush1.bf16.msra.mxu0 0
  %780 = vmatprep.subr.bf16.mxu0 0
  %781 = vmatpush1.bf16.msra.mxu0 0
  %782 = vmatprep.subr.bf16.mxu0 0
  %783 = vmatpush1.bf16.msra.mxu0 0
  %784 = vmatprep.subr.bf16.mxu0 0
  %785 = vmatpush1.bf16.msra.mxu0 0
  %786 = vmatprep.subr.bf16.mxu0 0
  %787 = vmatpush1.bf16.msra.mxu0 0
  %788 = vmatprep.subr.bf16.mxu0 0
  %789 = vmatpush1.bf16.msra.mxu0 0
  %790 = vmatprep.subr.bf16.mxu0 0
  %791 = vmatpush1.bf16.msra.mxu0 0
  %792 = vmatprep.subr.bf16.mxu0 0
  %793 = vmatpush1.bf16.msra.mxu0 0
  %794 = vmatprep.subr.bf16.mxu0 0
  %795 = vmatpush1.bf16.msra.mxu0 0
  %796 = vmatprep.subr.bf16.mxu0 0
  %797 = vmatpush1.bf16.msra.mxu0 0
  %798 = vmatprep.subr.bf16.mxu0 0
  %799 = vmatpush1.bf16.msra.mxu0 0
  %800 = vmatprep.mubr.bf16.mxu0 0
  %801 = vmatmul.mubr.bf16.gmra.mrb[0].mxu0 %v766
  %v802 = vpop.f32.mrb[0].mxu0
  %v803 = vadd.f32 %v761, %v802
  %v804 = vpop.f32.mrb[0].mxu0
  %v805 = vadd.f32 %v762, %v804
  %v806 = vpop.f32.mrb[0].mxu0
  %v807 = vpop.f32.mrb[0].mxu0
  %808 = vdwg.mxu0
  %v809 = vxor.u32 %v803, 2147483648
  %v810 = vmul.f32 %v809, 1.442695
  %v811 = vpow.pop %v810
  %v812 = vadd.f32 %v811, 1.0
  %v813 = vrcp.pop %v812
  %v814 = vmul.f32 1.0, %v813
  %v815 = vtanh.pop %v805
  %v816 = vxor.u32 %v805, 2147483648
  %v817 = vmul.f32 %v816, 1.442695
  %v818 = vpow.pop %v817
  %v819 = vadd.f32 %v818, 1.0
  %v820 = vrcp.pop %v819
  %v821 = vmul.f32 1.0, %v820
  %v822 = vmul.f32 %v814, %v740
  %v823 = vmul.f32 %v814, %v815
  %825 = vrot.lane.b32.xlu0 %v823, 64
  %v826 = vpop.permute.xlu0 %825
  %v828 = vadd.f32 %v822, %v826
  %v829 = vtanh.pop %v828
  %v830 = vmul.f32 %v821, %v829
  %v831 = vpack.c.bf16 %v830, %v830
  %v833 = vunpack.c.l.b16 %v831
  %v834 = vpack.c.b16 %v833, %v833
  %835 = vrot.lane.b32.xlu0 %v834, 64
  %v836 = vpop.permute.xlu0 %835
  %s838 = scalar_lea.vmem %s6, 28
  %839 = vst.msk [vmem:[%s838] sm:$0xf] %vm216, %v836
  %840 = vrot.lane.b32.xlu0 %v834, 32
  %v841 = vpop.permute.xlu0 %840
  %843 = vst.msk [vmem:[%s63] sm:$0xf] %vm216, %v841
  %845 = vrot.lane.b32.xlu0 %v830, 64
  %v846 = vpop.permute.xlu0 %845
  %848 = vst.msk [vmem:[#allocation2] sm:$0xff] %vm138, %v846
  %850 = vrot.lane.b32.xlu0 %v828, 64
  %v851 = vpop.permute.xlu0 %850
  %853 = vst.msk [vmem:[#allocation3] sm:$0xff] %vm138, %v851
  %854 = vst.msk [vmem:[%s8] sm:$0xff] %vm138, %v846
  %855 = vst.msk [vmem:[%s9] sm:$0xff] %vm138, %v851
  %s856 = ssub.s32 0, 0
  %s857 = smul.u32 8, %s856
  %p858 = scmp.lt.s32.totalorder %s857, 7
  %s859 = scalar_select %p858, %s857, 7
  %s860 = smul.addr %s859, 4
  %s861 = scalar_lea.vmem %s7, %s860
  // Predicated region
  $region30: #{blstm_forward.6} parent=0 // pred_check
    _
  $region31: #{blstm_forward.6} parent=0 // pred_check_branch
    %863 = sbr.rel (0) target = $region33
  $region32: #{blstm_forward.6} parent=0 // pred_region
    _
  $region33: #{blstm_forward.6} parent=0 // pred_fallthru
    _
  // Predicated region
  $region34: #{blstm_forward.6} parent=0 // pred_check
    _
  $region35: #{blstm_forward.6} parent=0 // pred_check_branch
    %865 = sbr.rel (0) target = $region37
  $region36: #{blstm_forward.6} parent=0 // pred_region
    %s866 = ssub.s32 0, 0
    %s867 = smul.u32 8, %s866
  $region37: #{blstm_forward.6} parent=0 // pred_fallthru
    _
  // Predicated region
  $region38: #{blstm_forward.6} parent=0 // pred_check
    _
  $region39: #{blstm_forward.6} parent=0 // pred_check_branch
    %869 = sbr.rel (0) target = $region41
  $region40: #{blstm_forward.6} parent=0 // pred_region
    _
  $region41: #{blstm_forward.6} parent=0 // pred_fallthru
    _
  // Predicated region
  $region42: #{blstm_forward.6} parent=0 // pred_check
    _
  $region43: #{blstm_forward.6} parent=0 // pred_check_branch
    %871 = sbr.rel (0) target = $region45
  $region44: #{blstm_forward.6} parent=0 // pred_region
    _
  $region45: #{blstm_forward.6} parent=0 // pred_fallthru
    _
  // Predicated region
  $region46: #{blstm_forward.6} parent=0 // pred_check
    _
  $region47: #{blstm_forward.6} parent=0 // pred_check_branch
    %873 = sbr.rel (0) target = $region49
  $region48: #{blstm_forward.6} parent=0 // pred_region
    _
  $region49: #{blstm_forward.6} parent=0 // pred_fallthru
    _
  // Predicated region
  $region50: #{blstm_forward.6} parent=0 // pred_check
    _
  $region51: #{blstm_forward.6} parent=0 // pred_check_branch
    %875 = sbr.rel (0) target = $region53
  $region52: #{blstm_forward.6} parent=0 // pred_region
    %s876 = ssub.s32 0, 0
    %s877 = smul.u32 8, %s876
    %p878 = scmp.lt.s32.totalorder %s877, 7
    %s879 = scalar_select %p878, %s877, 7
    %s880 = smul.addr %s879, 4
    %s881 = scalar_lea.vmem %s7, %s880
  $region53: #{blstm_forward.6} parent=0 // pred_fallthru
    _
  // Predicated region
  $region54: #{blstm_forward.6} parent=0 // pred_check
    _
  $region55: #{blstm_forward.6} parent=0 // pred_check_branch
    %883 = sbr.rel (0) target = $region57
  $region56: #{blstm_forward.6} parent=0 // pred_region
    _
  $region57: #{blstm_forward.6} parent=0 // pred_fallthru
    _
  // Predicated region
  $region58: #{blstm_forward.6} parent=0 // pred_check
    _
  $region59: #{blstm_forward.6} parent=0 // pred_check_branch
    %885 = sbr.rel (0) target = $region61
  $region60: #{blstm_forward.6} parent=0 // pred_region
    _
  $region61: #{blstm_forward.6} parent=0 // pred_fallthru
    _

</llo_original>
